<compile_context>
chip_gen: v7x
topology: tpu7x:2x2x1
jax: 0.10.0
libtpu: 0.0.40
codegen_flags: <defaults>
</compile_context>

<pallas_src>
import functools

import jax
import jax.numpy as jnp
from jax.experimental import pallas as pl
from jax.experimental.pallas import tpu as pltpu

ALPHA = 0.2
BN_EPS = 1e-5

_LANE = 128
_SUBLANE = 8
_MAX_TILE_M = 2048


# ---------------------------------------------------------------------------
# small helpers
# ---------------------------------------------------------------------------
def _round_up(x, m):
    return ((x + m - 1) // m) * m


def _cdiv(a, b):
    return -(-a // b)


@functools.lru_cache(maxsize=None)
def _vmem_limit():
    """Scoped-VMEM limit derived from the device: ~half of physical VMEM,
    clamped to [32 MiB, 96 MiB]  (v5e/v6e -> 64 MiB, v7x -> 32 MiB)."""
    try:
        cap = int(pltpu.get_tpu_info().vmem_capacity_bytes)
    except Exception:
        cap = 64 * 1024 * 1024
    return int(max(32 * 1024 * 1024, min(96 * 1024 * 1024, cap // 2)))


def _pad_feature_dim(k):
    """Pad the matmul K dim to a 128-lane multiple only when the zero-padding
    overhead is <= 25% (keeps the 256-wide v6e/v7x MXU lane-dense without
    inflating HBM bytes of memory-bound small-K layers)."""
    kp = _round_up(k, _LANE)
    return kp if (kp - k) * 4 <= k else k


def _pick_tiles(m, kp, cp, *, out_row_bytes, n_k_vecs=0):
    """Row-tile selection: fit double-buffered in/out blocks plus the resident
    weight/vector/stat blocks in the VMEM budget, minimize row padding, and keep
    an even number (>=2) of tiles so both v7x TensorCores get work."""
    limit = _vmem_limit()
    resident = 2 * (kp * cp * 2)              # weight block (bf16, double-buffered)
    resident += 2 * (n_k_vecs * kp * 4)       # per-K f32 scale/shift vectors
    resident += 4 * (2 * cp * 4)              # per-tile stats blocks / bias
    budget = int(limit * 0.7) - resident
    per_row = 2 * (kp * 2 + out_row_bytes)    # double-buffered patch-in + out tiles
    tm_cap = max(_SUBLANE, min(_MAX_TILE_M, budget // max(per_row, 1)))
    n_tiles = _cdiv(m, tm_cap)
    if m >= 2 * _SUBLANE:
        n_tiles = max(n_tiles, 2)             # give both v7x cores work
    if n_tiles > 1 and n_tiles % 2:
        n_tiles += 1
    tm = _round_up(_cdiv(m, n_tiles), _SUBLANE)
    grid_m = _cdiv(m, tm)
    return tm, grid_m, grid_m * tm


def _pad2(a, rows, cols):
    return jnp.pad(a, ((0, rows - a.shape[0]), (0, cols - a.shape[1])))


# ---------------------------------------------------------------------------
# Pallas kernels
# ---------------------------------------------------------------------------
def _mm_bias_lrelu_kernel(p_ref, w_ref, b_ref, o_ref, *, alpha):
    """conv1: leaky_relu(patches @ W + b); f32 epilogue, bf16 store."""
    x = jnp.dot(p_ref[...], w_ref[...], preferred_element_type=jnp.float32)
    x = x + b_ref[...]
    o_ref[...] = jnp.where(x >= 0, x, alpha * x).astype(o_ref.dtype)


def _mm_stats_kernel(*refs, alpha, in_affine, m_true, tile_m):
    """Matmul + per-tile per-channel sum / sum-of-squares (BN 'pass 1').

    When `in_affine`, the PREVIOUS BN's folded affine + leaky_relu is applied to
    the patch tile first (consumer-side fusion of BN 'pass 2').  Rows padded
    beyond the true M are zeroed so they never perturb the statistics.
    """
    if in_affine:
        p_ref, isc_ref, ish_ref, w_ref, x_ref, s_ref, ss_ref = refs
        p = p_ref[...].astype(jnp.float32) * isc_ref[...] + ish_ref[...]
        p = jnp.where(p >= 0, p, alpha * p)
        rows = pl.program_id(0) * tile_m + jax.lax.broadcasted_iota(
            jnp.int32, (tile_m, 1), 0)
        p = jnp.where(rows < m_true, p, 0.0).astype(jnp.bfloat16)
    else:
        p_ref, w_ref, x_ref, s_ref, ss_ref = refs
        p = p_ref[...]
    x = jnp.dot(p, w_ref[...], preferred_element_type=jnp.float32)
    x_ref[...] = x.astype(x_ref.dtype)                   # raw conv output, bf16
    s_ref[0] = jnp.sum(x, axis=0, keepdims=True)         # (1, Cp) f32
    ss_ref[0] = jnp.sum(x * x, axis=0, keepdims=True)    # (1, Cp) f32


def _final_head_kernel(x_ref, scale_ref, shift_ref, mask_ref, o_ref, *, alpha):
    """conv4 (k=3,s=1,p=1, Cout=1) + global spatial mean, fused with the conv3
    BN affine + leaky_relu.  Emits, per (batch, HW-tile), the 9 masked
    per-channel sums S[kh,kw,c] of the activation; the tiny 3x3xC dot with w4
    happens in plain JAX."""
    a = x_ref[0].astype(jnp.float32) * scale_ref[...] + shift_ref[...]
    a = jnp.where(a >= 0, a, alpha * a)                   # (thw, Cp) f32
    sums = [jnp.sum(a * mask_ref[:, t:t + 1], axis=0, keepdims=True)
            for t in range(9)]
    o_ref[0, 0] = jnp.concatenate(sums, axis=0)           # (9, Cp)


# ---------------------------------------------------------------------------
# pallas_call wrappers
# ---------------------------------------------------------------------------
def _conv_bias_lrelu(pf, w_mat, bias):
    m, k = pf.shape
    cout = w_mat.shape[1]
    kp = _pad_feature_dim(k)
    cp = _round_up(cout, _LANE)
    tm, grid_m, m_pad = _pick_tiles(m, kp, cp, out_row_bytes=cp * 2)

    p_b = _pad2(pf, m_pad, kp)                            # already bf16
    w_b = _pad2(w_mat, kp, cp).astype(jnp.bfloat16)
    b_p = jnp.pad(bias.astype(jnp.float32), (0, cp - cout)).reshape(1, cp)

    y = pl.pallas_call(
        functools.partial(_mm_bias_lrelu_kernel, alpha=ALPHA),
        out_shape=jax.ShapeDtypeStruct((m_pad, cp), jnp.bfloat16),
        grid=(grid_m,),
        in_specs=[
            pl.BlockSpec((tm, kp), lambda i: (i, 0)),
            pl.BlockSpec((kp, cp), lambda i: (0, 0)),
            pl.BlockSpec((1, cp), lambda i: (0, 0)),
        ],
        out_specs=pl.BlockSpec((tm, cp), lambda i: (i, 0)),
        compiler_params=pltpu.CompilerParams(
            dimension_semantics=("parallel",),
            vmem_limit_bytes=_vmem_limit()),
        cost_estimate=pl.CostEstimate(
            flops=2 * m_pad * kp * cp, transcendentals=0,
            bytes_accessed=m_pad * kp * 2 + kp * cp * 2 + m_pad * cp * 2),
    )(p_b, w_b, b_p)
    return y[:m, :cout]


def _conv_bn_stats(pf, w_mat, gamma, beta, in_scale=None, in_shift=None):
    """Conv matmul + batch statistics; returns (raw bf16 output, scale, shift)
    where scale/shift are the folded BN affine (to be applied by the consumer)."""
    m, k = pf.shape
    cout = w_mat.shape[1]
    kp = _pad_feature_dim(k)
    cp = _round_up(cout, _LANE)
    in_affine = in_scale is not None
    tm, grid_m, m_pad = _pick_tiles(m, kp, cp, out_row_bytes=cp * 2,
                                    n_k_vecs=2 if in_affine else 0)

    p_b = _pad2(pf, m_pad, kp)
    w_b = _pad2(w_mat, kp, cp).astype(jnp.bfloat16)

    in_specs = [pl.BlockSpec((tm, kp), lambda i: (i, 0))]
    args = [p_b]
    if in_affine:
        isc = jnp.pad(in_scale.astype(jnp.float32), (0, kp - k),
                      constant_values=1.0).reshape(1, kp)
        ish = jnp.pad(in_shift.astype(jnp.float32), (0, kp - k)).reshape(1, kp)
        in_specs += [pl.BlockSpec((1, kp), lambda i: (0, 0)),
                     pl.BlockSpec((1, kp), lambda i: (0, 0))]
        args += [isc, ish]
    in_specs.append(pl.BlockSpec((kp, cp), lambda i: (0, 0)))
    args.append(w_b)

    x_raw, psum, psumsq = pl.pallas_call(
        functools.partial(_mm_stats_kernel, alpha=ALPHA, in_affine=in_affine,
                          m_true=m, tile_m=tm),
        out_shape=(
            jax.ShapeDtypeStruct((m_pad, cp), jnp.bfloat16),
            jax.ShapeDtypeStruct((grid_m, 1, cp), jnp.float32),
            jax.ShapeDtypeStruct((grid_m, 1, cp), jnp.float32),
        ),
        grid=(grid_m,),
        in_specs=in_specs,
        out_specs=(
            pl.BlockSpec((tm, cp), lambda i: (i, 0)),
            pl.BlockSpec((1, 1, cp), lambda i: (i, 0, 0)),
            pl.BlockSpec((1, 1, cp), lambda i: (i, 0, 0)),
        ),
        compiler_params=pltpu.CompilerParams(
            dimension_semantics=("parallel",),
            vmem_limit_bytes=_vmem_limit()),
        cost_estimate=pl.CostEstimate(
            flops=2 * m_pad * kp * cp, transcendentals=0,
            bytes_accessed=(m_pad * kp * 2 + kp * cp * 2 + m_pad * cp * 2
                            + 2 * grid_m * cp * 4)),
    )(*args)

    # Tiny global reduction + BN scale/shift folding (plain JAX; O(Cout) work).
    # NOTE: var = E[x^2] - E[x]^2 in f32, clamped at 0; adequate for BN-scale
    # activations (stats come from the in-kernel f32 accumulator, not bf16 stores).
    inv_m = jnp.float32(1.0 / m)                 # divide by the TRUE row count
    mean = (jnp.sum(psum, axis=0).reshape(cp) * inv_m)[:cout]
    msq = (jnp.sum(psumsq, axis=0).reshape(cp) * inv_m)[:cout]
    var = jnp.maximum(msq - mean * mean, 0.0)
    scale = gamma.astype(jnp.float32) * jax.lax.rsqrt(var + BN_EPS)
    shift = beta.astype(jnp.float32) - mean * scale
    return x_raw[:m, :cout], scale, shift


def _final_head(x3_flat, n, h, w, scale, shift, w4_oihw, b4):
    """conv4 + spatial mean fused with the conv3 BN epilogue (no im2col)."""
    c = x3_flat.shape[1]
    hw = h * w
    cp = _round_up(c, _LANE)
    thw = _round_up(min(hw, 2048), _SUBLANE)
    hw_pad = _round_up(hw, thw)
    grid_hw = hw_pad // thw

    xr = jnp.pad(x3_flat.reshape(n, hw, c),
                 ((0, 0), (0, hw_pad - hw), (0, cp - c)))
    sc = jnp.pad(scale, (0, cp - c)).reshape(1, cp)
    sh = jnp.pad(shift, (0, cp - c)).reshape(1, cp)

    # 9 spatial masks (tiny, built in plain JAX): tap (kh,kw) of a 3x3/s1/p1 conv
    # sums the activation over rows R(kh) x cols C(kw); padded rows are masked out.
    idx = jnp.arange(hw_pad)
    hh, ww = idx // w, idx % w
    valid = idx < hw
    rm = [hh <= h - 2, jnp.ones_like(valid), hh >= 1]
    cm = [ww <= w - 2, jnp.ones_like(valid), ww >= 1]
    masks = jnp.stack([rm[kh] & cm[kw] & valid
                       for kh in range(3) for kw in range(3)],
                      axis=1).astype(jnp.float32)                 # (hw_pad, 9)

    partial = pl.pallas_call(
        functools.partial(_final_head_kernel, alpha=ALPHA),
        out_shape=jax.ShapeDtypeStruct((n, grid_hw, 9, cp), jnp.float32),
        grid=(n, grid_hw),
        in_specs=[
            pl.BlockSpec((1, thw, cp), lambda i, j: (i, j, 0)),
            pl.BlockSpec((1, cp), lambda i, j: (0, 0)),
            pl.BlockSpec((1, cp), lambda i, j: (0, 0)),
            pl.BlockSpec((thw, 9), lambda i, j: (j, 0)),
        ],
        out_specs=pl.BlockSpec((1, 1, 9, cp), lambda i, j: (i, j, 0, 0)),
        compiler_params=pltpu.CompilerParams(
            dimension_semantics=("parallel", "arbitrary"),
            vmem_limit_bytes=_vmem_limit()),
        cost_estimate=pl.CostEstimate(
            flops=13 * n * hw_pad * cp, transcendentals=0,
            bytes_accessed=n * hw_pad * cp * 2 + n * grid_hw * 9 * cp * 4),
    )(xr, sc, sh, masks)

    s = jnp.sum(partial, axis=1)[:, :, :c].reshape(n, 3, 3, c)    # (N,3,3,C)
    w4_t = jnp.transpose(w4_oihw[0], (1, 2, 0)).astype(jnp.float32)
    return (jnp.einsum("nhwc,hwc->n", s, w4_t) / jnp.float32(hw)
            + b4.astype(jnp.float32)[0])


# ---------------------------------------------------------------------------
# Plain-JAX glue: NHWC im2col (bf16, feature order (kh, kw, cin)) + weight reshape
# ---------------------------------------------------------------------------
def _im2col_nhwc(x, k, stride, pad, pad_value=None):
    # TODO(synk): fold this k*k window gather into the matmul kernels via manual
    # make_async_copy from the padded NHWC activation so the bf16 patch matrix
    # never round-trips through HBM.
    n, h, w, c = x.shape
    if pad_value is None:
        xp = jnp.pad(x, ((0, 0), (pad, pad), (pad, pad), (0, 0)))
    else:
        # Per-channel pad value chosen so the consumer's fused BN affine maps the
        # padded entries to exactly 0 (matching zero-padding of the activated tensor).
        full = jnp.broadcast_to(pad_value.astype(x.dtype).reshape(1, 1, 1, c),
                                (n, h + 2 * pad, w + 2 * pad, c))
        xp = jax.lax.dynamic_update_slice(full, x, (0, pad, pad, 0))
    ho = (h + 2 * pad - k) // stride + 1
    wo = (w + 2 * pad - k) // stride + 1
    cols = []
    for kh in range(k):
        for kw in range(k):
            cols.append(xp[:, kh:kh + ho * stride:stride,
                           kw:kw + wo * stride:stride, :])       # (n, ho, wo, c)
    return jnp.concatenate(cols, axis=-1), ho, wo


def _weight_to_matmul(w_oihw):
    cout, cin, kh, kw = w_oihw.shape
    # feature order (kh, kw, cin) to match the NHWC im2col above
    return jnp.transpose(w_oihw, (2, 3, 1, 0)).reshape(kh * kw * cin, cout)


# ---------------------------------------------------------------------------
# Forward pass
# ---------------------------------------------------------------------------
def discriminator_forward(x_nchw, params):
    # Single layout change + single cast up front; activations stay NHWC bf16.
    x = jnp.transpose(x_nchw, (0, 2, 3, 1)).astype(jnp.bfloat16)
    n = x.shape[0]

    # conv1: bias + leaky_relu (activated bf16 output).
    p1, h1, w1 = _im2col_nhwc(x, 4, 2, 1)
    a1 = _conv_bias_lrelu(p1.reshape(n * h1 * w1, -1),
                          _weight_to_matmul(params["w1"]), params["b1"])
    a1 = a1.reshape(n, h1, w1, -1)

    # conv2: matmul + batch stats.  Its BN affine + leaky_relu is fused into conv3.
    p2, h2, w2 = _im2col_nhwc(a1, 4, 2, 1)
    x2, scale2, shift2 = _conv_bn_stats(p2.reshape(n * h2 * w2, -1),
                                        _weight_to_matmul(params["w2"]),
                                        params["g2"], params["be2"])
    x2 = x2.reshape(n, h2, w2, -1)

    # conv3: consumes RAW conv2 output; conv2's BN affine + leaky_relu is applied to
    # the patch tile inside the kernel (spatial pad uses the affine's zero-preimage).
    pv2 = -shift2 / jnp.where(scale2 == 0, 1.0, scale2)
    p3, h3, w3 = _im2col_nhwc(x2, 4, 2, 1, pad_value=pv2)
    x3, scale3, shift3 = _conv_bn_stats(p3.reshape(n * h3 * w3, -1),
                                        _weight_to_matmul(params["w3"]),
                                        params["g3"], params["be3"],
                                        in_scale=jnp.tile(scale2, 16),
                                        in_shift=jnp.tile(shift2, 16))

    # conv4 (Cout=1, k=3, s=1, p=1) + global spatial mean, fused with conv3's BN
    # epilogue; no 9x im2col expansion.
    return _final_head(x3, n, h3, w3, scale3, shift3, params["w4"], params["b4"])


# ---------------------------------------------------------------------------
# Pure-JAX reference (lax.conv) for correctness checking
# ---------------------------------------------------------------------------
def reference_forward(x, params):
    def conv(x, w, stride, pad, bias=None):
        y = jax.lax.conv_general_dilated(
            x, w, (stride, stride), [(pad, pad), (pad, pad)],
            dimension_numbers=("NCHW", "OIHW", "NCHW"))
        if bias is not None:
            y = y + bias[None, :, None, None]
        return y

    def bn(x, g, b):
        mean = jnp.mean(x, axis=(0, 2, 3), keepdims=True)
        var = jnp.mean((x - mean) ** 2, axis=(0, 2, 3), keepdims=True)
        return (x - mean) * jax.lax.rsqrt(var + BN_EPS) * g[None, :, None, None] \
            + b[None, :, None, None]

    lrelu = lambda v: jnp.where(v >= 0, v, ALPHA * v)
    h = lrelu(conv(x, params["w1"], 2, 1, params["b1"]))
    h = lrelu(bn(conv(h, params["w2"], 2, 1), params["g2"], params["be2"]))
    h = lrelu(bn(conv(h, params["w3"], 2, 1), params["g3"], params["be3"]))
    h = conv(h, params["w4"], 1, 1, params["b4"])
    return h.reshape(h.shape[0], -1).mean(axis=1)


# ---------------------------------------------------------------------------
# Deterministic parameter init (shapes follow the PyTorch module)
# ---------------------------------------------------------------------------
def init_params(key, channels, conv_dim):
    ks = jax.random.split(key, 8)
    c1, c2, c3 = conv_dim, conv_dim * 2, conv_dim * 4
    std = 0.02
    return {
        "w1": std * jax.random.normal(ks[0], (c1, channels, 4, 4), jnp.float32),
        "b1": std * jax.random.normal(ks[1], (c1,), jnp.float32),
        "w2": std * jax.random.normal(ks[2], (c2, c1, 4, 4), jnp.float32),
        "g2": 1.0 + std * jax.random.normal(ks[3], (c2,), jnp.float32),
        "be2": jnp.zeros((c2,), jnp.float32),
        "w3": std * jax.random.normal(ks[4], (c3, c2, 4, 4), jnp.float32),
        "g3": 1.0 + std * jax.random.normal(ks[5], (c3,), jnp.float32),
        "be3": jnp.zeros((c3,), jnp.float32),
        "w4": std * jax.random.normal(ks[6], (1, c3, 3, 3), jnp.float32),
        "b4": std * jax.random.normal(ks[7], (1,), jnp.float32),
    }


if __name__ == "__main__":
    key = jax.random.PRNGKey(0)
    k_x, k_p = jax.random.split(key)

    N, C, H, W = 2, 4, 16, 16        # small NCHW input
    conv_dim = 8

    x = jax.random.normal(k_x, (N, C, H, W), jnp.float32)
    params = init_params(k_p, C, conv_dim)

    fwd = jax.jit(discriminator_forward)
    out = jax.block_until_ready(fwd(x, params))
    assert out.shape == (N,), out.shape

    ref = jax.block_until_ready(reference_forward(x, params))
    # bf16 MXU operands + bf16 inter-layer (raw) activations -> bf16-aware tolerance.
    assert jnp.allclose(out, ref, rtol=2e-2, atol=2e-2), (out, ref)

    print("KERNEL_OK")
</pallas_src>

<mosaic_0001>
module attributes {stable_mosaic.version = 11 : i64} {
  func.func @_mm_bias_lrelu_kernel(%arg0: i32, %arg1: memref<64x64xbf16, #tpu.memory_space<vmem>>, %arg2: memref<64x128xbf16, #tpu.memory_space<vmem>>, %arg3: memref<1x128xf32, #tpu.memory_space<vmem>>, %arg4: memref<64x128xbf16, #tpu.memory_space<vmem>>) attributes {dimension_semantics = [#tpu.dimension_semantics<parallel>], iteration_bounds = array<i64: 2>, scalar_prefetch = 0 : i64, scratch_operands = 0 : i64, tpu.core_type = #tpu.core_type<tc>, window_params = [{transform_indices = @transform_0, window_bounds = array<i64: 64, 64>}, {pipeline_mode = #tpu.pipeline_mode<synchronous>, transform_indices = @transform_1, window_bounds = array<i64: 64, 128>}, {pipeline_mode = #tpu.pipeline_mode<synchronous>, transform_indices = @transform_2, window_bounds = array<i64: 1, 128>}, {transform_indices = @transform_3, window_bounds = array<i64: 64, 128>}]} {
    %c0 = arith.constant 0 : index
    %c0_0 = arith.constant 0 : index
    %0 = vector.load %arg1[%c0, %c0_0] : memref<64x64xbf16, #tpu.memory_space<vmem>>, vector<64x64xbf16>
    %c0_1 = arith.constant 0 : index
    %c0_2 = arith.constant 0 : index
    %1 = vector.load %arg2[%c0_1, %c0_2] : memref<64x128xbf16, #tpu.memory_space<vmem>>, vector<64x128xbf16>
    %cst = arith.constant dense<0.000000e+00> : vector<64x128xf32>
    %2 = tpu.matmul %0, %1, %cst {dimension_numbers = #tpu.dot_dimension_numbers<[1], [0], [0], [1], [0, 0, 1, 1], [], []>} : vector<64x64xbf16>, vector<64x128xbf16>, vector<64x128xf32> -> vector<64x128xf32>
    %c0_3 = arith.constant 0 : index
    %c0_4 = arith.constant 0 : index
    %3 = vector.load %arg3[%c0_3, %c0_4] : memref<1x128xf32, #tpu.memory_space<vmem>>, vector<1x128xf32>
    %4 = vector.broadcast %3 : vector<1x128xf32> to vector<64x128xf32>
    %5 = arith.addf %2, %4 : vector<64x128xf32>
    %cst_5 = arith.constant 0.000000e+00 : f32
    %6 = vector.broadcast %cst_5 : f32 to vector<64x128xf32>
    %7 = arith.cmpf oge, %5, %6 : vector<64x128xf32>
    %cst_6 = arith.constant 2.000000e-01 : f32
    %8 = vector.broadcast %cst_6 : f32 to vector<64x128xf32>
    %9 = arith.mulf %8, %5 : vector<64x128xf32>
    %10 = arith.select %7, %5, %9 : vector<64x128xi1>, vector<64x128xf32>
    %11 = arith.truncf %10 : vector<64x128xf32> to vector<64x128xbf16>
    %c0_7 = arith.constant 0 : index
    %c0_8 = arith.constant 0 : index
    %12 = vector.load %arg4[%c0_7, %c0_8] : memref<64x128xbf16, #tpu.memory_space<vmem>>, vector<64x128xbf16>
    tpu.vector_store %arg4[%c0_7, %c0_8], %11 {strides = array<i32>} : memref<64x128xbf16, #tpu.memory_space<vmem>>, vector<64x128xbf16>,
    return
  }
  func.func @transform_0(%arg0: i32) -> (i32, i32) {
    %c0_i32 = arith.constant 0 : i32
    %c0_i32_0 = arith.constant 0 : i32
    return %arg0, %c0_i32 : i32, i32
  }
  func.func @transform_1(%arg0: i32) -> (i32, i32) {
    %c0_i32 = arith.constant 0 : i32
    %c0_i32_0 = arith.constant 0 : i32
    %c0_i32_1 = arith.constant 0 : i32
    return %c0_i32, %c0_i32_0 : i32, i32
  }
  func.func @transform_2(%arg0: i32) -> (i32, i32) {
    %c0_i32 = arith.constant 0 : i32
    %c0_i32_0 = arith.constant 0 : i32
    %c0_i32_1 = arith.constant 0 : i32
    return %c0_i32, %c0_i32_0 : i32, i32
  }
  func.func @transform_3(%arg0: i32) -> (i32, i32) {
    %c0_i32 = arith.constant 0 : i32
    %c0_i32_0 = arith.constant 0 : i32
    return %arg0, %c0_i32 : i32, i32
  }
}

module attributes {stable_mosaic.version = 11 : i64} {
  func.func @_mm_stats_kernel(%arg0: i32, %arg1: memref<16x128xbf16, #tpu.memory_space<vmem>>, %arg2: memref<128x128xbf16, #tpu.memory_space<vmem>>, %arg3: memref<16x128xbf16, #tpu.memory_space<vmem>>, %arg4: memref<1x1x128xf32, #tpu.memory_space<vmem>>, %arg5: memref<1x1x128xf32, #tpu.memory_space<vmem>>) attributes {dimension_semantics = [#tpu.dimension_semantics<parallel>], iteration_bounds = array<i64: 2>, scalar_prefetch = 0 : i64, scratch_operands = 0 : i64, tpu.core_type = #tpu.core_type<tc>, window_params = [{transform_indices = @transform_0, window_bounds = array<i64: 16, 128>}, {pipeline_mode = #tpu.pipeline_mode<synchronous>, transform_indices = @transform_1, window_bounds = array<i64: 128, 128>}, {transform_indices = @transform_2, window_bounds = array<i64: 16, 128>}, {transform_indices = @transform_3, window_bounds = array<i64: 1, 1, 128>}, {transform_indices = @transform_4, window_bounds = array<i64: 1, 1, 128>}]} {
    %c0 = arith.constant 0 : index
    %c0_0 = arith.constant 0 : index
    %0 = vector.load %arg1[%c0, %c0_0] : memref<16x128xbf16, #tpu.memory_space<vmem>>, vector<16x128xbf16>
    %c0_1 = arith.constant 0 : index
    %c0_2 = arith.constant 0 : index
    %1 = vector.load %arg2[%c0_1, %c0_2] : memref<128x128xbf16, #tpu.memory_space<vmem>>, vector<128x128xbf16>
    %cst = arith.constant dense<0.000000e+00> : vector<16x128xf32>
    %2 = tpu.matmul %0, %1, %cst {dimension_numbers = #tpu.dot_dimension_numbers<[1], [0], [0], [1], [0, 0, 1, 1], [], []>} : vector<16x128xbf16>, vector<128x128xbf16>, vector<16x128xf32> -> vector<16x128xf32>
    %3 = arith.truncf %2 : vector<16x128xf32> to vector<16x128xbf16>
    %c0_3 = arith.constant 0 : index
    %c0_4 = arith.constant 0 : index
    %4 = vector.load %arg3[%c0_3, %c0_4] : memref<16x128xbf16, #tpu.memory_space<vmem>>, vector<16x128xbf16>
    tpu.vector_store %arg3[%c0_3, %c0_4], %3 {strides = array<i32>} : memref<16x128xbf16, #tpu.memory_space<vmem>>, vector<16x128xbf16>,
    %cst_5 = arith.constant dense<0.000000e+00> : vector<128xf32>
    %5 = vector.multi_reduction <add>, %2, %cst_5 [0] : vector<16x128xf32> to vector<128xf32>
    %6 = vector.shape_cast %5 : vector<128xf32> to vector<1x128xf32>
    %c0_6 = arith.constant 0 : index
    %c0_7 = arith.constant 0 : index
    %c0_8 = arith.constant 0 : index
    %7 = vector.load %arg4[%c0_6, %c0_7, %c0_8] : memref<1x1x128xf32, #tpu.memory_space<vmem>>, vector<1x1x128xf32>
    %8 = vector.shape_cast %7 : vector<1x1x128xf32> to vector<1x128xf32>
    %9 = vector.shape_cast %6 : vector<1x128xf32> to vector<1x1x128xf32>
    tpu.vector_store %arg4[%c0_6, %c0_7, %c0_8], %9 {strides = array<i32>} : memref<1x1x128xf32, #tpu.memory_space<vmem>>, vector<1x1x128xf32>,
    %10 = arith.mulf %2, %2 : vector<16x128xf32>
    %cst_9 = arith.constant dense<0.000000e+00> : vector<128xf32>
    %11 = vector.multi_reduction <add>, %10, %cst_9 [0] : vector<16x128xf32> to vector<128xf32>
    %12 = vector.shape_cast %11 : vector<128xf32> to vector<1x128xf32>
    %c0_10 = arith.constant 0 : index
    %c0_11 = arith.constant 0 : index
    %c0_12 = arith.constant 0 : index
    %13 = vector.load %arg5[%c0_10, %c0_11, %c0_12] : memref<1x1x128xf32, #tpu.memory_space<vmem>>, vector<1x1x128xf32>
    %14 = vector.shape_cast %13 : vector<1x1x128xf32> to vector<1x128xf32>
    %15 = vector.shape_cast %12 : vector<1x128xf32> to vector<1x1x128xf32>
    tpu.vector_store %arg5[%c0_10, %c0_11, %c0_12], %15 {strides = array<i32>} : memref<1x1x128xf32, #tpu.memory_space<vmem>>, vector<1x1x128xf32>,
    return
  }
  func.func @transform_0(%arg0: i32) -> (i32, i32) {
    %c0_i32 = arith.constant 0 : i32
    %c0_i32_0 = arith.constant 0 : i32
    return %arg0, %c0_i32 : i32, i32
  }
  func.func @transform_1(%arg0: i32) -> (i32, i32) {
    %c0_i32 = arith.constant 0 : i32
    %c0_i32_0 = arith.constant 0 : i32
    %c0_i32_1 = arith.constant 0 : i32
    return %c0_i32, %c0_i32_0 : i32, i32
  }
  func.func @transform_2(%arg0: i32) -> (i32, i32) {
    %c0_i32 = arith.constant 0 : i32
    %c0_i32_0 = arith.constant 0 : i32
    return %arg0, %c0_i32 : i32, i32
  }
  func.func @transform_3(%arg0: i32) -> (i32, i32, i32) {
    %c0_i32 = arith.constant 0 : i32
    %c0_i32_0 = arith.constant 0 : i32
    %c0_i32_1 = arith.constant 0 : i32
    return %arg0, %c0_i32, %c0_i32_0 : i32, i32, i32
  }
  func.func @transform_4(%arg0: i32) -> (i32, i32, i32) {
    %c0_i32 = arith.constant 0 : i32
    %c0_i32_0 = arith.constant 0 : i32
    %c0_i32_1 = arith.constant 0 : i32
    return %arg0, %c0_i32, %c0_i32_0 : i32, i32, i32
  }
}

module attributes {stable_mosaic.version = 11 : i64} {
  func.func @_mm_stats_kernel(%arg0: i32, %arg1: memref<8x256xbf16, #tpu.memory_space<vmem>>, %arg2: memref<1x256xf32, #tpu.memory_space<vmem>>, %arg3: memref<1x256xf32, #tpu.memory_space<vmem>>, %arg4: memref<256x128xbf16, #tpu.memory_space<vmem>>, %arg5: memref<8x128xbf16, #tpu.memory_space<vmem>>, %arg6: memref<1x1x128xf32, #tpu.memory_space<vmem>>, %arg7: memref<1x1x128xf32, #tpu.memory_space<vmem>>) attributes {dimension_semantics = [#tpu.dimension_semantics<parallel>], iteration_bounds = array<i64: 1>, scalar_prefetch = 0 : i64, scratch_operands = 0 : i64, tpu.core_type = #tpu.core_type<tc>, window_params = [{transform_indices = @transform_0, window_bounds = array<i64: 8, 256>}, {pipeline_mode = #tpu.pipeline_mode<synchronous>, transform_indices = @transform_1, window_bounds = array<i64: 1, 256>}, {pipeline_mode = #tpu.pipeline_mode<synchronous>, transform_indices = @transform_2, window_bounds = array<i64: 1, 256>}, {pipeline_mode = #tpu.pipeline_mode<synchronous>, transform_indices = @transform_3, window_bounds = array<i64: 256, 128>}, {transform_indices = @transform_4, window_bounds = array<i64: 8, 128>}, {transform_indices = @transform_5, window_bounds = array<i64: 1, 1, 128>}, {transform_indices = @transform_6, window_bounds = array<i64: 1, 1, 128>}]} {
    %c0 = arith.constant 0 : index
    %c0_0 = arith.constant 0 : index
    %0 = vector.load %arg1[%c0, %c0_0] : memref<8x256xbf16, #tpu.memory_space<vmem>>, vector<8x256xbf16>
    %1 = arith.extf %0 : vector<8x256xbf16> to vector<8x256xf32>
    %c0_1 = arith.constant 0 : index
    %c0_2 = arith.constant 0 : index
    %2 = vector.load %arg2[%c0_1, %c0_2] : memref<1x256xf32, #tpu.memory_space<vmem>>, vector<1x256xf32>
    %3 = vector.broadcast %2 : vector<1x256xf32> to vector<8x256xf32>
    %4 = arith.mulf %1, %3 : vector<8x256xf32>
    %c0_3 = arith.constant 0 : index
    %c0_4 = arith.constant 0 : index
    %5 = vector.load %arg3[%c0_3, %c0_4] : memref<1x256xf32, #tpu.memory_space<vmem>>, vector<1x256xf32>
    %6 = vector.broadcast %5 : vector<1x256xf32> to vector<8x256xf32>
    %7 = arith.addf %4, %6 : vector<8x256xf32>
    %cst = arith.constant 0.000000e+00 : f32
    %8 = vector.broadcast %cst : f32 to vector<8x256xf32>
    %9 = arith.cmpf oge, %7, %8 : vector<8x256xf32>
    %cst_5 = arith.constant 2.000000e-01 : f32
    %10 = vector.broadcast %cst_5 : f32 to vector<8x256xf32>
    %11 = arith.mulf %10, %7 : vector<8x256xf32>
    %12 = arith.select %9, %7, %11 : vector<8x256xi1>, vector<8x256xf32>
    %c8_i32 = arith.constant 8 : i32
    %13 = arith.muli %arg0, %c8_i32 : i32
    %14 = tpu.iota {dimensions = array<i32: 0>} : vector<8x1xi32>
    %15 = vector.broadcast %13 : i32 to vector<8x1xi32>
    %16 = arith.addi %15, %14 : vector<8x1xi32>
    %c8_i32_6 = arith.constant 8 : i32
    %17 = vector.broadcast %c8_i32_6 : i32 to vector<8x1xi32>
    %18 = arith.cmpi slt, %16, %17 : vector<8x1xi32>
    %cst_7 = arith.constant 0.000000e+00 : f32
    %19 = vector.shape_cast %18 : vector<8x1xi1> to vector<8x1xi1>
    %20 = vector.broadcast %19 : vector<8x1xi1> to vector<8x256xi1>
    %21 = vector.broadcast %cst_7 : f32 to vector<8x256xf32>
    %22 = arith.select %20, %12, %21 : vector<8x256xi1>, vector<8x256xf32>
    %23 = arith.truncf %22 : vector<8x256xf32> to vector<8x256xbf16>
    %c0_8 = arith.constant 0 : index
    %c0_9 = arith.constant 0 : index
    %24 = vector.load %arg4[%c0_8, %c0_9] : memref<256x128xbf16, #tpu.memory_space<vmem>>, vector<256x128xbf16>
    %cst_10 = arith.constant dense<0.000000e+00> : vector<8x128xf32>
    %25 = tpu.matmul %23, %24, %cst_10 {dimension_numbers = #tpu.dot_dimension_numbers<[1], [0], [0], [1], [0, 0, 1, 1], [], []>} : vector<8x256xbf16>, vector<256x128xbf16>, vector<8x128xf32> -> vector<8x128xf32>
    %26 = arith.truncf %25 : vector<8x128xf32> to vector<8x128xbf16>
    %c0_11 = arith.constant 0 : index
    %c0_12 = arith.constant 0 : index
    %27 = vector.load %arg5[%c0_11, %c0_12] : memref<8x128xbf16, #tpu.memory_space<vmem>>, vector<8x128xbf16>
    tpu.vector_store %arg5[%c0_11, %c0_12], %26 {strides = array<i32>} : memref<8x128xbf16, #tpu.memory_space<vmem>>, vector<8x128xbf16>,
    %cst_13 = arith.constant dense<0.000000e+00> : vector<128xf32>
    %28 = vector.multi_reduction <add>, %25, %cst_13 [0] : vector<8x128xf32> to vector<128xf32>
    %29 = vector.shape_cast %28 : vector<128xf32> to vector<1x128xf32>
    %c0_14 = arith.constant 0 : index
    %c0_15 = arith.constant 0 : index
    %c0_16 = arith.constant 0 : index
    %30 = vector.load %arg6[%c0_14, %c0_15, %c0_16] : memref<1x1x128xf32, #tpu.memory_space<vmem>>, vector<1x1x128xf32>
    %31 = vector.shape_cast %30 : vector<1x1x128xf32> to vector<1x128xf32>
    %32 = vector.shape_cast %29 : vector<1x128xf32> to vector<1x1x128xf32>
    tpu.vector_store %arg6[%c0_14, %c0_15, %c0_16], %32 {strides = array<i32>} : memref<1x1x128xf32, #tpu.memory_space<vmem>>, vector<1x1x128xf32>,
    %33 = arith.mulf %25, %25 : vector<8x128xf32>
    %cst_17 = arith.constant dense<0.000000e+00> : vector<128xf32>
    %34 = vector.multi_reduction <add>, %33, %cst_17 [0] : vector<8x128xf32> to vector<128xf32>
    %35 = vector.shape_cast %34 : vector<128xf32> to vector<1x128xf32>
    %c0_18 = arith.constant 0 : index
    %c0_19 = arith.constant 0 : index
    %c0_20 = arith.constant 0 : index
    %36 = vector.load %arg7[%c0_18, %c0_19, %c0_20] : memref<1x1x128xf32, #tpu.memory_space<vmem>>, vector<1x1x128xf32>
    %37 = vector.shape_cast %36 : vector<1x1x128xf32> to vector<1x128xf32>
    %38 = vector.shape_cast %35 : vector<1x128xf32> to vector<1x1x128xf32>
    tpu.vector_store %arg7[%c0_18, %c0_19, %c0_20], %38 {strides = array<i32>} : memref<1x1x128xf32, #tpu.memory_space<vmem>>, vector<1x1x128xf32>,
    return
  }
  func.func @transform_0(%arg0: i32) -> (i32, i32) {
    %c0_i32 = arith.constant 0 : i32
    %c0_i32_0 = arith.constant 0 : i32
    return %arg0, %c0_i32 : i32, i32
  }
  func.func @transform_1(%arg0: i32) -> (i32, i32) {
    %c0_i32 = arith.constant 0 : i32
    %c0_i32_0 = arith.constant 0 : i32
    %c0_i32_1 = arith.constant 0 : i32
    return %c0_i32, %c0_i32_0 : i32, i32
  }
  func.func @transform_2(%arg0: i32) -> (i32, i32) {
    %c0_i32 = arith.constant 0 : i32
    %c0_i32_0 = arith.constant 0 : i32
    %c0_i32_1 = arith.constant 0 : i32
    return %c0_i32, %c0_i32_0 : i32, i32
  }
  func.func @transform_3(%arg0: i32) -> (i32, i32) {
    %c0_i32 = arith.constant 0 : i32
    %c0_i32_0 = arith.constant 0 : i32
    %c0_i32_1 = arith.constant 0 : i32
    return %c0_i32, %c0_i32_0 : i32, i32
  }
  func.func @transform_4(%arg0: i32) -> (i32, i32) {
    %c0_i32 = arith.constant 0 : i32
    %c0_i32_0 = arith.constant 0 : i32
    return %arg0, %c0_i32 : i32, i32
  }
  func.func @transform_5(%arg0: i32) -> (i32, i32, i32) {
    %c0_i32 = arith.constant 0 : i32
    %c0_i32_0 = arith.constant 0 : i32
    %c0_i32_1 = arith.constant 0 : i32
    return %arg0, %c0_i32, %c0_i32_0 : i32, i32, i32
  }
  func.func @transform_6(%arg0: i32) -> (i32, i32, i32) {
    %c0_i32 = arith.constant 0 : i32
    %c0_i32_0 = arith.constant 0 : i32
    %c0_i32_1 = arith.constant 0 : i32
    return %arg0, %c0_i32, %c0_i32_0 : i32, i32, i32
  }
}

module attributes {stable_mosaic.version = 11 : i64} {
  func.func @_final_head_kernel(%arg0: i32, %arg1: i32, %arg2: memref<1x8x128xbf16, #tpu.memory_space<vmem>>, %arg3: memref<1x128xf32, #tpu.memory_space<vmem>>, %arg4: memref<1x128xf32, #tpu.memory_space<vmem>>, %arg5: memref<8x9xf32, #tpu.memory_space<vmem>>, %arg6: memref<1x1x9x128xf32, #tpu.memory_space<vmem>>) attributes {dimension_semantics = [#tpu.dimension_semantics<parallel>, #tpu.dimension_semantics<arbitrary>], iteration_bounds = array<i64: 2, 1>, scalar_prefetch = 0 : i64, scratch_operands = 0 : i64, tpu.core_type = #tpu.core_type<tc>, window_params = [{transform_indices = @transform_0, window_bounds = array<i64: 1, 8, 128>}, {pipeline_mode = #tpu.pipeline_mode<synchronous>, transform_indices = @transform_1, window_bounds = array<i64: 1, 128>}, {pipeline_mode = #tpu.pipeline_mode<synchronous>, transform_indices = @transform_2, window_bounds = array<i64: 1, 128>}, {transform_indices = @transform_3, window_bounds = array<i64: 8, 9>}, {transform_indices = @transform_4, window_bounds = array<i64: 1, 1, 9, 128>}]} {
    %c0 = arith.constant 0 : index
    %c0_0 = arith.constant 0 : index
    %c0_1 = arith.constant 0 : index
    %0 = vector.load %arg2[%c0, %c0_0, %c0_1] : memref<1x8x128xbf16, #tpu.memory_space<vmem>>, vector<1x8x128xbf16>
    %1 = vector.shape_cast %0 : vector<1x8x128xbf16> to vector<8x128xbf16>
    %2 = arith.extf %1 : vector<8x128xbf16> to vector<8x128xf32>
    %c0_2 = arith.constant 0 : index
    %c0_3 = arith.constant 0 : index
    %3 = vector.load %arg3[%c0_2, %c0_3] : memref<1x128xf32, #tpu.memory_space<vmem>>, vector<1x128xf32>
    %4 = vector.broadcast %3 : vector<1x128xf32> to vector<8x128xf32>
    %5 = arith.mulf %2, %4 : vector<8x128xf32>
    %c0_4 = arith.constant 0 : index
    %c0_5 = arith.constant 0 : index
    %6 = vector.load %arg4[%c0_4, %c0_5] : memref<1x128xf32, #tpu.memory_space<vmem>>, vector<1x128xf32>
    %7 = vector.broadcast %6 : vector<1x128xf32> to vector<8x128xf32>
    %8 = arith.addf %5, %7 : vector<8x128xf32>
    %cst = arith.constant 0.000000e+00 : f32
    %9 = vector.broadcast %cst : f32 to vector<8x128xf32>
    %10 = arith.cmpf oge, %8, %9 : vector<8x128xf32>
    %cst_6 = arith.constant 2.000000e-01 : f32
    %11 = vector.broadcast %cst_6 : f32 to vector<8x128xf32>
    %12 = arith.mulf %11, %8 : vector<8x128xf32>
    %13 = arith.select %10, %8, %12 : vector<8x128xi1>, vector<8x128xf32>
    %c0_7 = arith.constant 0 : index
    %c0_8 = arith.constant 0 : index
    %14 = vector.load %arg5[%c0_7, %c0_8] : memref<8x9xf32, #tpu.memory_space<vmem>>, vector<8x1xf32>
    %15 = vector.broadcast %14 : vector<8x1xf32> to vector<8x128xf32>
    %16 = arith.mulf %13, %15 : vector<8x128xf32>
    %cst_9 = arith.constant dense<0.000000e+00> : vector<128xf32>
    %17 = vector.multi_reduction <add>, %16, %cst_9 [0] : vector<8x128xf32> to vector<128xf32>
    %18 = vector.shape_cast %17 : vector<128xf32> to vector<1x128xf32>
    %c0_10 = arith.constant 0 : index
    %c1 = arith.constant 1 : index
    %19 = vector.load %arg5[%c0_10, %c1] : memref<8x9xf32, #tpu.memory_space<vmem>>, vector<8x1xf32>
    %20 = vector.broadcast %19 : vector<8x1xf32> to vector<8x128xf32>
    %21 = arith.mulf %13, %20 : vector<8x128xf32>
    %cst_11 = arith.constant dense<0.000000e+00> : vector<128xf32>
    %22 = vector.multi_reduction <add>, %21, %cst_11 [0] : vector<8x128xf32> to vector<128xf32>
    %23 = vector.shape_cast %22 : vector<128xf32> to vector<1x128xf32>
    %c0_12 = arith.constant 0 : index
    %c2 = arith.constant 2 : index
    %24 = vector.load %arg5[%c0_12, %c2] : memref<8x9xf32, #tpu.memory_space<vmem>>, vector<8x1xf32>
    %25 = vector.broadcast %24 : vector<8x1xf32> to vector<8x128xf32>
    %26 = arith.mulf %13, %25 : vector<8x128xf32>
    %cst_13 = arith.constant dense<0.000000e+00> : vector<128xf32>
    %27 = vector.multi_reduction <add>, %26, %cst_13 [0] : vector<8x128xf32> to vector<128xf32>
    %28 = vector.shape_cast %27 : vector<128xf32> to vector<1x128xf32>
    %c0_14 = arith.constant 0 : index
    %c3 = arith.constant 3 : index
    %29 = vector.load %arg5[%c0_14, %c3] : memref<8x9xf32, #tpu.memory_space<vmem>>, vector<8x1xf32>
    %30 = vector.broadcast %29 : vector<8x1xf32> to vector<8x128xf32>
    %31 = arith.mulf %13, %30 : vector<8x128xf32>
    %cst_15 = arith.constant dense<0.000000e+00> : vector<128xf32>
    %32 = vector.multi_reduction <add>, %31, %cst_15 [0] : vector<8x128xf32> to vector<128xf32>
    %33 = vector.shape_cast %32 : vector<128xf32> to vector<1x128xf32>
    %c0_16 = arith.constant 0 : index
    %c4 = arith.constant 4 : index
    %34 = vector.load %arg5[%c0_16, %c4] : memref<8x9xf32, #tpu.memory_space<vmem>>, vector<8x1xf32>
    %35 = vector.broadcast %34 : vector<8x1xf32> to vector<8x128xf32>
    %36 = arith.mulf %13, %35 : vector<8x128xf32>
    %cst_17 = arith.constant dense<0.000000e+00> : vector<128xf32>
    %37 = vector.multi_reduction <add>, %36, %cst_17 [0] : vector<8x128xf32> to vector<128xf32>
    %38 = vector.shape_cast %37 : vector<128xf32> to vector<1x128xf32>
    %c0_18 = arith.constant 0 : index
    %c5 = arith.constant 5 : index
    %39 = vector.load %arg5[%c0_18, %c5] : memref<8x9xf32, #tpu.memory_space<vmem>>, vector<8x1xf32>
    %40 = vector.broadcast %39 : vector<8x1xf32> to vector<8x128xf32>
    %41 = arith.mulf %13, %40 : vector<8x128xf32>
    %cst_19 = arith.constant dense<0.000000e+00> : vector<128xf32>
    %42 = vector.multi_reduction <add>, %41, %cst_19 [0] : vector<8x128xf32> to vector<128xf32>
    %43 = vector.shape_cast %42 : vector<128xf32> to vector<1x128xf32>
    %c0_20 = arith.constant 0 : index
    %c6 = arith.constant 6 : index
    %44 = vector.load %arg5[%c0_20, %c6] : memref<8x9xf32, #tpu.memory_space<vmem>>, vector<8x1xf32>
    %45 = vector.broadcast %44 : vector<8x1xf32> to vector<8x128xf32>
    %46 = arith.mulf %13, %45 : vector<8x128xf32>
    %cst_21 = arith.constant dense<0.000000e+00> : vector<128xf32>
    %47 = vector.multi_reduction <add>, %46, %cst_21 [0] : vector<8x128xf32> to vector<128xf32>
    %48 = vector.shape_cast %47 : vector<128xf32> to vector<1x128xf32>
    %c0_22 = arith.constant 0 : index
    %c7 = arith.constant 7 : index
    %49 = vector.load %arg5[%c0_22, %c7] : memref<8x9xf32, #tpu.memory_space<vmem>>, vector<8x1xf32>
    %50 = vector.broadcast %49 : vector<8x1xf32> to vector<8x128xf32>
    %51 = arith.mulf %13, %50 : vector<8x128xf32>
    %cst_23 = arith.constant dense<0.000000e+00> : vector<128xf32>
    %52 = vector.multi_reduction <add>, %51, %cst_23 [0] : vector<8x128xf32> to vector<128xf32>
    %53 = vector.shape_cast %52 : vector<128xf32> to vector<1x128xf32>
    %c0_24 = arith.constant 0 : index
    %c8 = arith.constant 8 : index
    %54 = vector.load %arg5[%c0_24, %c8] : memref<8x9xf32, #tpu.memory_space<vmem>>, vector<8x1xf32>
    %55 = vector.broadcast %54 : vector<8x1xf32> to vector<8x128xf32>
    %56 = arith.mulf %13, %55 : vector<8x128xf32>
    %cst_25 = arith.constant dense<0.000000e+00> : vector<128xf32>
    %57 = vector.multi_reduction <add>, %56, %cst_25 [0] : vector<8x128xf32> to vector<128xf32>
    %58 = vector.shape_cast %57 : vector<128xf32> to vector<1x128xf32>
    %59 = tpu.concatenate %18, %23, %28, %33, %38, %43, %48, %53, %58 in 0 : vector<1x128xf32>, vector<1x128xf32>, vector<1x128xf32>, vector<1x128xf32>, vector<1x128xf32>, vector<1x128xf32>, vector<1x128xf32>, vector<1x128xf32>, vector<1x128xf32> -> vector<9x128xf32>
    %c0_26 = arith.constant 0 : index
    %c0_27 = arith.constant 0 : index
    %c0_28 = arith.constant 0 : index
    %c0_29 = arith.constant 0 : index
    %60 = vector.load %arg6[%c0_26, %c0_27, %c0_28, %c0_29] : memref<1x1x9x128xf32, #tpu.memory_space<vmem>>, vector<1x1x9x128xf32>
    %61 = vector.shape_cast %60 : vector<1x1x9x128xf32> to vector<9x128xf32>
    %62 = vector.shape_cast %59 : vector<9x128xf32> to vector<1x1x9x128xf32>
    tpu.vector_store %arg6[%c0_26, %c0_27, %c0_28, %c0_29], %62 {strides = array<i32>} : memref<1x1x9x128xf32, #tpu.memory_space<vmem>>, vector<1x1x9x128xf32>,
    return
  }
  func.func @transform_0(%arg0: i32, %arg1: i32) -> (i32, i32, i32) {
    %c0_i32 = arith.constant 0 : i32
    %c0_i32_0 = arith.constant 0 : i32
    return %arg0, %arg1, %c0_i32 : i32, i32, i32
  }
  func.func @transform_1(%arg0: i32, %arg1: i32) -> (i32, i32) {
    %c0_i32 = arith.constant 0 : i32
    %c0_i32_0 = arith.constant 0 : i32
    %c0_i32_1 = arith.constant 0 : i32
    return %c0_i32, %c0_i32_0 : i32, i32
  }
  func.func @transform_2(%arg0: i32, %arg1: i32) -> (i32, i32) {
    %c0_i32 = arith.constant 0 : i32
    %c0_i32_0 = arith.constant 0 : i32
    %c0_i32_1 = arith.constant 0 : i32
    return %c0_i32, %c0_i32_0 : i32, i32
  }
  func.func @transform_3(%arg0: i32, %arg1: i32) -> (i32, i32) {
    %c0_i32 = arith.constant 0 : i32
    %c0_i32_0 = arith.constant 0 : i32
    return %arg1, %c0_i32 : i32, i32
  }
  func.func @transform_4(%arg0: i32, %arg1: i32) -> (i32, i32, i32, i32) {
    %c0_i32 = arith.constant 0 : i32
    %c0_i32_0 = arith.constant 0 : i32
    %c0_i32_1 = arith.constant 0 : i32
    return %arg0, %arg1, %c0_i32, %c0_i32_0 : i32, i32, i32, i32
  }
}

</mosaic_0001>

<llo_original>
// kernel: discriminator_forward.4
$region0: #{discriminator_forward.4}
  #allocation0 [shape = 'u32[]', space=smem, size = 0x4, offset = 0x4, fixed_abs, tag = 'smem constant byte address 0x4 - core index']
  #allocation1 [shape = 'u32[144,128]{1,0:T(1,128)}', space=vmem, size = 0x12000, scoped, tag = 'internal scratch']
  %s0 = inlined_call_operand.vmem [shape: bf16[128,64], index: 0, kind: input, shape index: {}]
  %s1 = inlined_call_operand.vmem [shape: bf16[64,128], index: 1, kind: input, shape index: {}]
  %s2 = inlined_call_operand.vmem [shape: f32[1,128], index: 2, kind: input, shape index: {}]
  %s3 = inlined_call_operand.vmem [shape: bf16[128,128], index: 3, kind: output, shape index: {}]
  %s4 = sld [smem:[#allocation0]]
  $region45: #{discriminator_forward.4} parent=0
    _
  %s6 = ssub.s32 1, %s4
  %s7 = scalar_select 0, %s6, %s4
  loop: start=0, step=1, limit=4
  $region2: #{discriminator_forward.4} parent=0 // loop_pre_header
    _
  $region3: #{discriminator_forward.4} parent=0 // loop_header
    %s9 = sphi 0, %s13
    %p10 = scmp.ge.s32.totalorder %s9, 4
    %s19 = sphi 0, %s21
    %s22 = sphi 0, %s19
    %s23 = sphi 0, %s22
    %s39 = sphi 0, %s23
    %s43 = sphi 0, %s43
    %s45 = sphi 0, %s43
    %s46 = sphi 0, %s45
    %s60 = sphi 0, %s46
    %s64 = sphi 0, %s64
    %s66 = sphi 0, %s64
    %s67 = sphi 0, %s66
    %s81 = sphi 0, %s67
    %s87 = sphi 0, %s89
    %s90 = sphi 0, %s87
    %s91 = sphi 0, %s90
    %s107 = sphi 0, %s91
  $region4: #{discriminator_forward.4} parent=0 // loop_header_branch
    %12 = sbr.rel (%p10) target = $region8
  $region5: #{discriminator_forward.4} parent=0 // loop_body
    %s14 = ssub.s32 %s9, 1
    %s15 = ssub.s32 %s9, 2
    %s16 = sadd.s32 %s9, 1
    %s17 = ssub.s32 %s9, %s16
    %p18 = scmp.eq.s32.totalorder %s17, 0
    %s20 = sadd.s32 %s19, 1
    %s21 = scalar_select %p18, %s19, %s20
    %p24 = pneg %p18
    %p25 = scmp.eq.s32.totalorder %s9, 1
    %p26 = por %p24, %p25
    %p27 = scmp.ne.s32.totalorder %s19, %s22
    %p28 = scmp.eq.s32.totalorder %s9, 0
    %p29 = por %p27, %p28
    %p30 = scmp.ne.s32.totalorder %s19, %s22
    %p31 = scmp.eq.s32.totalorder %s14, 1
    %p32 = por %p30, %p31
    %p33 = scmp.ne.s32.totalorder %s22, %s23
    %p34 = scmp.eq.s32.totalorder %s14, 0
    %p35 = por %p33, %p34
    %p36 = scmp.ne.s32.totalorder %s22, %s23
    %p37 = scmp.eq.s32.totalorder %s15, 1
    %p38 = por %p36, %p37
    %p40 = scmp.ne.s32.totalorder %s23, %s39
    %p41 = scmp.eq.s32.totalorder %s15, 0
    %p42 = por %p40, %p41
    %s44 = sadd.s32 %s43, 1
    %p47 = scmp.eq.s32.totalorder %s9, 1
    %p48 = scmp.ne.s32.totalorder %s43, %s45
    %p49 = scmp.eq.s32.totalorder %s9, 0
    %p50 = por %p48, %p49
    %p51 = scmp.ne.s32.totalorder %s43, %s45
    %p52 = scmp.eq.s32.totalorder %s14, 1
    %p53 = por %p51, %p52
    %p54 = scmp.ne.s32.totalorder %s45, %s46
    %p55 = scmp.eq.s32.totalorder %s14, 0
    %p56 = por %p54, %p55
    %p57 = scmp.ne.s32.totalorder %s45, %s46
    %p58 = scmp.eq.s32.totalorder %s15, 1
    %p59 = por %p57, %p58
    %p61 = scmp.ne.s32.totalorder %s46, %s60
    %p62 = scmp.eq.s32.totalorder %s15, 0
    %p63 = por %p61, %p62
    %s65 = sadd.s32 %s64, 1
    %p68 = scmp.eq.s32.totalorder %s9, 1
    %p69 = scmp.ne.s32.totalorder %s64, %s66
    %p70 = scmp.eq.s32.totalorder %s9, 0
    %p71 = por %p69, %p70
    %p72 = scmp.ne.s32.totalorder %s64, %s66
    %p73 = scmp.eq.s32.totalorder %s14, 1
    %p74 = por %p72, %p73
    %p75 = scmp.ne.s32.totalorder %s66, %s67
    %p76 = scmp.eq.s32.totalorder %s14, 0
    %p77 = por %p75, %p76
    %p78 = scmp.ne.s32.totalorder %s66, %s67
    %p79 = scmp.eq.s32.totalorder %s15, 1
    %p80 = por %p78, %p79
    %p82 = scmp.ne.s32.totalorder %s67, %s81
    %p83 = scmp.eq.s32.totalorder %s15, 0
    %p84 = por %p82, %p83
    %s85 = ssub.s32 %s9, %s16
    %p86 = scmp.eq.s32.totalorder %s85, 0
    %s88 = sadd.s32 %s87, 1
    %s89 = scalar_select %p86, %s87, %s88
    %p92 = pneg %p86
    %p93 = scmp.eq.s32.totalorder %s9, 1
    %p94 = por %p92, %p93
    %p95 = scmp.ne.s32.totalorder %s87, %s90
    %p96 = scmp.eq.s32.totalorder %s9, 0
    %p97 = por %p95, %p96
    %p98 = scmp.ne.s32.totalorder %s87, %s90
    %p99 = scmp.eq.s32.totalorder %s14, 1
    %p100 = por %p98, %p99
    %p101 = scmp.ne.s32.totalorder %s90, %s91
    %p102 = scmp.eq.s32.totalorder %s14, 0
    %p103 = por %p101, %p102
    %p104 = scmp.ne.s32.totalorder %s90, %s91
    %p105 = scmp.eq.s32.totalorder %s15, 1
    %p106 = por %p104, %p105
    %p108 = scmp.ne.s32.totalorder %s91, %s107
    %p109 = scmp.eq.s32.totalorder %s15, 0
    %p110 = por %p108, %p109
    %p111 = scmp.le.s32.totalorder 1, %s9
    %p112 = scmp.lt.s32.totalorder %s9, 3
    %p113 = pnand %p111, %p112
    %p114 = pneg %p113
    // Predicated region
    $region9: #{discriminator_forward.4} parent=5 // pred_check
      _
    $region10: #{discriminator_forward.4} parent=5 // pred_check_branch
      %116 = sbr.rel (%p113) target = $region12
    $region11: #{discriminator_forward.4} parent=5 // pred_region
      %s117 = ssub.s32 %s9, 1
      // Predicated region
      $region13: #{discriminator_forward.4} parent=11 // pred_check
        %p118 = pneg %p56
      $region14: #{discriminator_forward.4} parent=11 // pred_check_branch
        %120 = sbr.rel (%p118) target = $region16
      $region15: #{discriminator_forward.4} parent=11 // pred_region
        _
      $region16: #{discriminator_forward.4} parent=11 // pred_fallthru
        _
      // Predicated region
      $region17: #{discriminator_forward.4} parent=11 // pred_check
        %p121 = pneg %p77
      $region18: #{discriminator_forward.4} parent=11 // pred_check_branch
        %123 = sbr.rel (%p121) target = $region20
      $region19: #{discriminator_forward.4} parent=11 // pred_region
        _
      $region20: #{discriminator_forward.4} parent=11 // pred_fallthru
        _
    $region12: #{discriminator_forward.4} parent=5 // pred_fallthru
      _
    %p124 = scmp.lt.s32.totalorder %s9, 2
    // Predicated region
    $region21: #{discriminator_forward.4} parent=5 // pred_check
      %p125 = pneg %p124
    $region22: #{discriminator_forward.4} parent=5 // pred_check_branch
      %127 = sbr.rel (%p125) target = $region24
    $region23: #{discriminator_forward.4} parent=5 // pred_region
      // Predicated region
      $region25: #{discriminator_forward.4} parent=23 // pred_check
        %p128 = pneg %p29
      $region26: #{discriminator_forward.4} parent=23 // pred_check_branch
        %130 = sbr.rel (%p128) target = $region28
      $region27: #{discriminator_forward.4} parent=23 // pred_region
        %s131 = smul.u32 8, %s9
        %p132 = scmp.lt.s32.totalorder %s131, 15
        %s133 = scalar_select %p132, %s131, 15
        %s134 = smul.addr %s133, 4
        %s135 = scalar_lea.vmem %s0, %s134
        %s136 = smul.u32 8, %s9
      $region28: #{discriminator_forward.4} parent=23 // pred_fallthru
        _
    $region24: #{discriminator_forward.4} parent=5 // pred_fallthru
      _
    %p137 = scmp.le.s32.totalorder 1, %s9
    %p138 = scmp.lt.s32.totalorder %s9, 3
    %p139 = pnand %p137, %p138
    %p140 = pneg %p139
    // Predicated region
    $region29: #{discriminator_forward.4} parent=5 // pred_check
      _
    $region30: #{discriminator_forward.4} parent=5 // pred_check_branch
      %142 = sbr.rel (%p139) target = $region32
    $region31: #{discriminator_forward.4} parent=5 // pred_region
      %s143 = ssub.s32 %s9, 1
      %s144 = smul.u32 8, %s14
      %p145 = scmp.lt.s32.totalorder %s144, 15
      %s146 = scalar_select %p145, %s144, 15
      %s147 = smul.addr %s146, 4
      %s148 = scalar_lea.vmem %s0, %s147
      %p149 = pneg %p35
      %p150 = pneg %p32
      %p151 = pneg %p56
      %p152 = pneg %p53
      %p153 = pneg %p77
      %p154 = pneg %p74
      %p155 = pneg %p103
      %p156 = pneg %p100
      %s157 = smul.u32 8, %s14
      %p158 = scmp.lt.s32.totalorder %s157, 15
      %s159 = scalar_select %p158, %s157, 15
      %s160 = smul.addr %s159, 4
      %s161 = scalar_lea.vmem %s3, %s160
      %s162 = smul.u32 8, %s14
      %p163 = scmp.lt.s32.totalorder %s162, 15
      %s164 = scalar_select %p163, %s162, 15
      %s165 = smul.addr %s164, 4
      %s166 = scalar_lea.vmem %s0, %s165
      %s167 = smul.u32 8, %s14
      %s168 = smul.u32 8, %s14
      %p169 = scmp.lt.s32.totalorder %s168, 15
      %s170 = scalar_select %p169, %s168, 15
      %s171 = smul.addr %s170, 4
      %s172 = scalar_lea.vmem %s3, %s171
      %s173 = smul.u32 8, %s14
      %v175 = vld [vmem:[%s166] sm:$0xf]
      %v176 = vld [vmem:[%s166 + $0x4] sm:$0xf]
      %v177 = vld [vmem:[%s166 + $0x8] sm:$0xf]
      %v178 = vld [vmem:[%s166 + $0xc] sm:$0xf]
      %v179 = vld [vmem:[%s166 + $0x10] sm:$0xf]
      %v180 = vld [vmem:[%s166 + $0x14] sm:$0xf]
      %v181 = vld [vmem:[%s166 + $0x18] sm:$0xf]
      %v182 = vld [vmem:[%s166 + $0x1c] sm:$0xf]
      %v183 = vld [vmem:[%s1] sm:$0xf]
      %v184 = vld [vmem:[%s1 + $0x4] sm:$0xf]
      %v185 = vld [vmem:[%s1 + $0x8] sm:$0xf]
      %v186 = vld [vmem:[%s1 + $0xc] sm:$0xf]
      %v187 = vld [vmem:[%s1 + $0x10] sm:$0xf]
      %v188 = vld [vmem:[%s1 + $0x14] sm:$0xf]
      %v189 = vld [vmem:[%s1 + $0x18] sm:$0xf]
      %v190 = vld [vmem:[%s1 + $0x1c] sm:$0xf]
      %v191 = vld [vmem:[%s2] sm:$0x1]
      %v193 = vlaneseq
      %v194 = vshrl.u32 %v193, 7
      %v195 = vsub.s32 0, %v194
      %v196 = vrot.slane %v191, %v195
      %v206 = vunpack.c.l.b16 %v175
      %v207 = vunpack.c.l.b16 %v176
      %v208 = vunpack.c.l.b16 %v177
      %v209 = vunpack.c.l.b16 %v178
      %v210 = vunpack.c.l.b16 %v179
      %v211 = vunpack.c.l.b16 %v180
      %v212 = vunpack.c.l.b16 %v181
      %v213 = vunpack.c.l.b16 %v182
      %v214 = vpack.c.b16 %v207, %v206
      %v215 = vpack.c.b16 %v209, %v208
      %v216 = vpack.c.b16 %v211, %v210
      %v217 = vpack.c.b16 %v213, %v212
      %v226 = vunpack.c.l.b16 %v183
      %v227 = vunpack.c.l.b16 %v184
      %v228 = vunpack.c.l.b16 %v185
      %v229 = vunpack.c.l.b16 %v186
      %v230 = vunpack.c.l.b16 %v187
      %v231 = vunpack.c.l.b16 %v188
      %v232 = vunpack.c.l.b16 %v189
      %v233 = vunpack.c.l.b16 %v190
      %v234 = vpack.c.b16 %v227, %v226
      %v235 = vpack.c.b16 %v229, %v228
      %v236 = vpack.c.b16 %v231, %v230
      %v237 = vpack.c.b16 %v233, %v232
      %vm242 = vcmask 523264
      %v244 = vsel %vm242, %v214, 0
      %v247 = vsel %vm242, %v215, 0
      %v250 = vsel %vm242, %v216, 0
      %v253 = vsel %vm242, %v217, 0
      %255 = vmatprep.subr.bf16.mxu0 0
      %256 = vmatpush1.bf16.msra.mxu0 %v234
      %257 = vmatprep.subr.bf16.mxu0 0
      %258 = vmatpush1.bf16.msra.mxu0 %v235
      %259 = vmatprep.subr.bf16.mxu0 0
      %260 = vmatpush1.bf16.msra.mxu0 %v236
      %261 = vmatprep.subr.bf16.mxu0 0
      %262 = vmatpush1.bf16.msra.mxu0 %v237
      %263 = vmatprep.subr.bf16.mxu0 0
      %264 = vmatpush1.bf16.msra.mxu0 0
      %265 = vmatprep.subr.bf16.mxu0 0
      %266 = vmatpush1.bf16.msra.mxu0 0
      %267 = vmatprep.subr.bf16.mxu0 0
      %268 = vmatpush1.bf16.msra.mxu0 0
      %269 = vmatprep.subr.bf16.mxu0 0
      %270 = vmatpush1.bf16.msra.mxu0 0
      %271 = vmatprep.subr.bf16.mxu0 0
      %272 = vmatpush1.bf16.msra.mxu0 0
      %273 = vmatprep.subr.bf16.mxu0 0
      %274 = vmatpush1.bf16.msra.mxu0 0
      %275 = vmatprep.subr.bf16.mxu0 0
      %276 = vmatpush1.bf16.msra.mxu0 0
      %277 = vmatprep.subr.bf16.mxu0 0
      %278 = vmatpush1.bf16.msra.mxu0 0
      %279 = vmatprep.subr.bf16.mxu0 0
      %280 = vmatpush1.bf16.msra.mxu0 0
      %281 = vmatprep.subr.bf16.mxu0 0
      %282 = vmatpush1.bf16.msra.mxu0 0
      %283 = vmatprep.subr.bf16.mxu0 0
      %284 = vmatpush1.bf16.msra.mxu0 0
      %285 = vmatprep.subr.bf16.mxu0 0
      %286 = vmatpush1.bf16.msra.mxu0 0
      %287 = vmatprep.mubr.bf16.mxu0 0
      %288 = vmatmul.mubr.bf16.gmra.mrb[0].mxu0 %v244
      %v289 = vpop.f32.mrb[0].mxu0
      %v290 = vadd.f32 %v196, %v289
      %v291 = vpop.f32.mrb[0].mxu0
      %v292 = vpop.f32.mrb[0].mxu0
      %v293 = vadd.f32 %v196, %v292
      %v294 = vpop.f32.mrb[0].mxu0
      %295 = vmatprep.mubr.bf16.mxu0 0
      %296 = vmatmul.mubr.bf16.gmra.mrb[0].mxu0 %v247
      %v297 = vpop.f32.mrb[0].mxu0
      %v298 = vadd.f32 %v196, %v297
      %v299 = vpop.f32.mrb[0].mxu0
      %v300 = vpop.f32.mrb[0].mxu0
      %v301 = vadd.f32 %v196, %v300
      %v302 = vpop.f32.mrb[0].mxu0
      %303 = vmatprep.mubr.bf16.mxu0 0
      %304 = vmatmul.mubr.bf16.gmra.mrb[0].mxu0 %v250
      %v305 = vpop.f32.mrb[0].mxu0
      %v306 = vadd.f32 %v196, %v305
      %v307 = vpop.f32.mrb[0].mxu0
      %v308 = vpop.f32.mrb[0].mxu0
      %v309 = vadd.f32 %v196, %v308
      %v310 = vpop.f32.mrb[0].mxu0
      %311 = vmatprep.mubr.bf16.mxu0 0
      %312 = vmatmul.mubr.bf16.gmra.mrb[0].mxu0 %v253
      %v313 = vpop.f32.mrb[0].mxu0
      %v314 = vadd.f32 %v196, %v313
      %v315 = vpop.f32.mrb[0].mxu0
      %v316 = vpop.f32.mrb[0].mxu0
      %v317 = vadd.f32 %v196, %v316
      %v318 = vpop.f32.mrb[0].mxu0
      %319 = vdwg.mxu0
      %vm320 = vcmp.ge.f32.partialorder %v290, 0.0
      %vm321 = vcmp.ge.f32.partialorder %v293, 0.0
      %vm322 = vcmp.ge.f32.partialorder %v298, 0.0
      %vm323 = vcmp.ge.f32.partialorder %v301, 0.0
      %vm324 = vcmp.ge.f32.partialorder %v306, 0.0
      %vm325 = vcmp.ge.f32.partialorder %v309, 0.0
      %vm326 = vcmp.ge.f32.partialorder %v314, 0.0
      %vm327 = vcmp.ge.f32.partialorder %v317, 0.0
      %v328 = vmul.f32 %v290, 0.2
      %v329 = vmul.f32 %v293, 0.2
      %v330 = vmul.f32 %v298, 0.2
      %v331 = vmul.f32 %v301, 0.2
      %v332 = vmul.f32 %v306, 0.2
      %v333 = vmul.f32 %v309, 0.2
      %v334 = vmul.f32 %v314, 0.2
      %v335 = vmul.f32 %v317, 0.2
      %v336 = vsel %vm320, %v290, %v328
      %v337 = vsel %vm321, %v293, %v329
      %v338 = vsel %vm322, %v298, %v330
      %v339 = vsel %vm323, %v301, %v331
      %v340 = vsel %vm324, %v306, %v332
      %v341 = vsel %vm325, %v309, %v333
      %v342 = vsel %vm326, %v314, %v334
      %v343 = vsel %vm327, %v317, %v335
      %v344 = vpack.c.bf16 %v337, %v336
      %v345 = vpack.c.bf16 %v339, %v338
      %v346 = vpack.c.bf16 %v341, %v340
      %v347 = vpack.c.bf16 %v343, %v342
      %v352 = vunpack.c.l.b16 %v344
      %v353 = vunpack.c.h.b16 %v344
      %v354 = vunpack.c.l.b16 %v345
      %v355 = vunpack.c.h.b16 %v345
      %v356 = vunpack.c.l.b16 %v346
      %v357 = vunpack.c.h.b16 %v346
      %v358 = vunpack.c.l.b16 %v347
      %v359 = vunpack.c.h.b16 %v347
      %v360 = vpack.c.b16 %v352, %v352
      %v361 = vpack.c.b16 %v353, %v353
      %v362 = vpack.c.b16 %v354, %v354
      %v363 = vpack.c.b16 %v355, %v355
      %v364 = vpack.c.b16 %v356, %v356
      %v365 = vpack.c.b16 %v357, %v357
      %v366 = vpack.c.b16 %v358, %v358
      %v367 = vpack.c.b16 %v359, %v359
      %376 = vst [vmem:[%s172] sm:$0xf] %v360
      %377 = vst [vmem:[%s172 + $0x4] sm:$0xf] %v361
      %378 = vst [vmem:[%s172 + $0x8] sm:$0xf] %v362
      %379 = vst [vmem:[%s172 + $0xc] sm:$0xf] %v363
      %380 = vst [vmem:[%s172 + $0x10] sm:$0xf] %v364
      %381 = vst [vmem:[%s172 + $0x14] sm:$0xf] %v365
      %382 = vst [vmem:[%s172 + $0x18] sm:$0xf] %v366
      %383 = vst [vmem:[%s172 + $0x1c] sm:$0xf] %v367
      %s384 = smul.u32 8, %s14
      %p385 = scmp.lt.s32.totalorder %s384, 15
      %s386 = scalar_select %p385, %s384, 15
      %s387 = smul.addr %s386, 4
      %s388 = scalar_lea.vmem %s3, %s387
      // Predicated region
      $region33: #{discriminator_forward.4} parent=31 // pred_check
        %p389 = pneg %p100
      $region34: #{discriminator_forward.4} parent=31 // pred_check_branch
        %391 = sbr.rel (%p389) target = $region36
      $region35: #{discriminator_forward.4} parent=31 // pred_region
        %s392 = smul.u32 8, %s14
      $region36: #{discriminator_forward.4} parent=31 // pred_fallthru
        _
    $region32: #{discriminator_forward.4} parent=5 // pred_fallthru
      _
    %p393 = scmp.le.s32.totalorder 2, %s9
    // Predicated region
    $region37: #{discriminator_forward.4} parent=5 // pred_check
      %p394 = pneg %p393
    $region38: #{discriminator_forward.4} parent=5 // pred_check_branch
      %396 = sbr.rel (%p394) target = $region40
    $region39: #{discriminator_forward.4} parent=5 // pred_region
      %s397 = ssub.s32 %s9, 2
      // Predicated region
      $region41: #{discriminator_forward.4} parent=39 // pred_check
        %p398 = pneg %p106
      $region42: #{discriminator_forward.4} parent=39 // pred_check_branch
        %400 = sbr.rel (%p398) target = $region44
      $region43: #{discriminator_forward.4} parent=39 // pred_region
        %s401 = smul.u32 8, %s15
        %p402 = scmp.lt.s32.totalorder %s401, 15
        %s403 = scalar_select %p402, %s401, 15
        %s404 = smul.addr %s403, 4
        %s405 = scalar_lea.vmem %s3, %s404
      $region44: #{discriminator_forward.4} parent=39 // pred_fallthru
        _
    $region40: #{discriminator_forward.4} parent=5 // pred_fallthru
      _
  $region6: #{discriminator_forward.4} parent=0 // loop_footer
    %s13 = sadd.s32 1, %s9
  $region7: #{discriminator_forward.4} parent=0 // loop_footer_branch
    %8 = sbr.rel target = $region3
  $region8: #{discriminator_forward.4} parent=0 // loop_exit
    _

// kernel: discriminator_forward.5
$region0: #{discriminator_forward.5}
  #allocation0 [shape = 'u32[]', space=smem, size = 0x4, offset = 0x4, fixed_abs, tag = 'smem constant byte address 0x4 - core index']
  #allocation1 [shape = 'u32[144,128]{1,0:T(1,128)}', space=vmem, size = 0x12000, scoped, tag = 'internal scratch']
  %s0 = inlined_call_operand.vmem [shape: bf16[32,128], index: 0, kind: input, shape index: {}]
  %s1 = inlined_call_operand.vmem [shape: bf16[128,128], index: 1, kind: input, shape index: {}]
  %s2 = inlined_call_operand.vmem [shape: bf16[32,128], index: 2, kind: output, shape index: {0}]
  %s3 = inlined_call_operand.vmem [shape: f32[2,1,128], index: 3, kind: output, shape index: {1}]
  %s4 = inlined_call_operand.vmem [shape: f32[2,1,128], index: 4, kind: output, shape index: {2}]
  %5 = xla_tuple %s2, %s3, %s4
  %s6 = sld [smem:[#allocation0]]
  $region57: #{discriminator_forward.5} parent=0
    _
  %s8 = ssub.s32 1, %s6
  %s9 = scalar_select 0, %s8, %s6
  loop: start=0, step=1, limit=4
  $region2: #{discriminator_forward.5} parent=0 // loop_pre_header
    _
  $region3: #{discriminator_forward.5} parent=0 // loop_header
    %s11 = sphi 0, %s15
    %p12 = scmp.ge.s32.totalorder %s11, 4
    %s21 = sphi 0, %s23
    %s24 = sphi 0, %s21
    %s25 = sphi 0, %s24
    %s41 = sphi 0, %s25
    %s45 = sphi 0, %s45
    %s47 = sphi 0, %s45
    %s48 = sphi 0, %s47
    %s62 = sphi 0, %s48
    %s68 = sphi 0, %s70
    %s71 = sphi 0, %s68
    %s72 = sphi 0, %s71
    %s88 = sphi 0, %s72
    %s94 = sphi 0, %s96
    %s97 = sphi 0, %s94
    %s98 = sphi 0, %s97
    %s114 = sphi 0, %s98
    %s120 = sphi 0, %s122
    %s123 = sphi 0, %s120
    %s124 = sphi 0, %s123
    %s140 = sphi 0, %s124
  $region4: #{discriminator_forward.5} parent=0 // loop_header_branch
    %14 = sbr.rel (%p12) target = $region8
  $region5: #{discriminator_forward.5} parent=0 // loop_body
    %s16 = ssub.s32 %s11, 1
    %s17 = ssub.s32 %s11, 2
    %s18 = sadd.s32 %s11, 1
    %s19 = ssub.s32 %s11, %s18
    %p20 = scmp.eq.s32.totalorder %s19, 0
    %s22 = sadd.s32 %s21, 1
    %s23 = scalar_select %p20, %s21, %s22
    %p26 = pneg %p20
    %p27 = scmp.eq.s32.totalorder %s11, 1
    %p28 = por %p26, %p27
    %p29 = scmp.ne.s32.totalorder %s21, %s24
    %p30 = scmp.eq.s32.totalorder %s11, 0
    %p31 = por %p29, %p30
    %p32 = scmp.ne.s32.totalorder %s21, %s24
    %p33 = scmp.eq.s32.totalorder %s16, 1
    %p34 = por %p32, %p33
    %p35 = scmp.ne.s32.totalorder %s24, %s25
    %p36 = scmp.eq.s32.totalorder %s16, 0
    %p37 = por %p35, %p36
    %p38 = scmp.ne.s32.totalorder %s24, %s25
    %p39 = scmp.eq.s32.totalorder %s17, 1
    %p40 = por %p38, %p39
    %p42 = scmp.ne.s32.totalorder %s25, %s41
    %p43 = scmp.eq.s32.totalorder %s17, 0
    %p44 = por %p42, %p43
    %s46 = sadd.s32 %s45, 1
    %p49 = scmp.eq.s32.totalorder %s11, 1
    %p50 = scmp.ne.s32.totalorder %s45, %s47
    %p51 = scmp.eq.s32.totalorder %s11, 0
    %p52 = por %p50, %p51
    %p53 = scmp.ne.s32.totalorder %s45, %s47
    %p54 = scmp.eq.s32.totalorder %s16, 1
    %p55 = por %p53, %p54
    %p56 = scmp.ne.s32.totalorder %s47, %s48
    %p57 = scmp.eq.s32.totalorder %s16, 0
    %p58 = por %p56, %p57
    %p59 = scmp.ne.s32.totalorder %s47, %s48
    %p60 = scmp.eq.s32.totalorder %s17, 1
    %p61 = por %p59, %p60
    %p63 = scmp.ne.s32.totalorder %s48, %s62
    %p64 = scmp.eq.s32.totalorder %s17, 0
    %p65 = por %p63, %p64
    %s66 = ssub.s32 %s11, %s18
    %p67 = scmp.eq.s32.totalorder %s66, 0
    %s69 = sadd.s32 %s68, 1
    %s70 = scalar_select %p67, %s68, %s69
    %p73 = pneg %p67
    %p74 = scmp.eq.s32.totalorder %s11, 1
    %p75 = por %p73, %p74
    %p76 = scmp.ne.s32.totalorder %s68, %s71
    %p77 = scmp.eq.s32.totalorder %s11, 0
    %p78 = por %p76, %p77
    %p79 = scmp.ne.s32.totalorder %s68, %s71
    %p80 = scmp.eq.s32.totalorder %s16, 1
    %p81 = por %p79, %p80
    %p82 = scmp.ne.s32.totalorder %s71, %s72
    %p83 = scmp.eq.s32.totalorder %s16, 0
    %p84 = por %p82, %p83
    %p85 = scmp.ne.s32.totalorder %s71, %s72
    %p86 = scmp.eq.s32.totalorder %s17, 1
    %p87 = por %p85, %p86
    %p89 = scmp.ne.s32.totalorder %s72, %s88
    %p90 = scmp.eq.s32.totalorder %s17, 0
    %p91 = por %p89, %p90
    %s92 = ssub.s32 %s11, %s18
    %p93 = scmp.eq.s32.totalorder %s92, 0
    %s95 = sadd.s32 %s94, 1
    %s96 = scalar_select %p93, %s94, %s95
    %p99 = pneg %p93
    %p100 = scmp.eq.s32.totalorder %s11, 1
    %p101 = por %p99, %p100
    %p102 = scmp.ne.s32.totalorder %s94, %s97
    %p103 = scmp.eq.s32.totalorder %s11, 0
    %p104 = por %p102, %p103
    %p105 = scmp.ne.s32.totalorder %s94, %s97
    %p106 = scmp.eq.s32.totalorder %s16, 1
    %p107 = por %p105, %p106
    %p108 = scmp.ne.s32.totalorder %s97, %s98
    %p109 = scmp.eq.s32.totalorder %s16, 0
    %p110 = por %p108, %p109
    %p111 = scmp.ne.s32.totalorder %s97, %s98
    %p112 = scmp.eq.s32.totalorder %s17, 1
    %p113 = por %p111, %p112
    %p115 = scmp.ne.s32.totalorder %s98, %s114
    %p116 = scmp.eq.s32.totalorder %s17, 0
    %p117 = por %p115, %p116
    %s118 = ssub.s32 %s11, %s18
    %p119 = scmp.eq.s32.totalorder %s118, 0
    %s121 = sadd.s32 %s120, 1
    %s122 = scalar_select %p119, %s120, %s121
    %p125 = pneg %p119
    %p126 = scmp.eq.s32.totalorder %s11, 1
    %p127 = por %p125, %p126
    %p128 = scmp.ne.s32.totalorder %s120, %s123
    %p129 = scmp.eq.s32.totalorder %s11, 0
    %p130 = por %p128, %p129
    %p131 = scmp.ne.s32.totalorder %s120, %s123
    %p132 = scmp.eq.s32.totalorder %s16, 1
    %p133 = por %p131, %p132
    %p134 = scmp.ne.s32.totalorder %s123, %s124
    %p135 = scmp.eq.s32.totalorder %s16, 0
    %p136 = por %p134, %p135
    %p137 = scmp.ne.s32.totalorder %s123, %s124
    %p138 = scmp.eq.s32.totalorder %s17, 1
    %p139 = por %p137, %p138
    %p141 = scmp.ne.s32.totalorder %s124, %s140
    %p142 = scmp.eq.s32.totalorder %s17, 0
    %p143 = por %p141, %p142
    %p144 = scmp.le.s32.totalorder 1, %s11
    %p145 = scmp.lt.s32.totalorder %s11, 3
    %p146 = pnand %p144, %p145
    %p147 = pneg %p146
    // Predicated region
    $region9: #{discriminator_forward.5} parent=5 // pred_check
      _
    $region10: #{discriminator_forward.5} parent=5 // pred_check_branch
      %149 = sbr.rel (%p146) target = $region12
    $region11: #{discriminator_forward.5} parent=5 // pred_region
      %s150 = ssub.s32 %s11, 1
      // Predicated region
      $region13: #{discriminator_forward.5} parent=11 // pred_check
        %p151 = pneg %p58
      $region14: #{discriminator_forward.5} parent=11 // pred_check_branch
        %153 = sbr.rel (%p151) target = $region16
      $region15: #{discriminator_forward.5} parent=11 // pred_region
        _
      $region16: #{discriminator_forward.5} parent=11 // pred_fallthru
        _
    $region12: #{discriminator_forward.5} parent=5 // pred_fallthru
      _
    %p154 = scmp.lt.s32.totalorder %s11, 2
    // Predicated region
    $region17: #{discriminator_forward.5} parent=5 // pred_check
      %p155 = pneg %p154
    $region18: #{discriminator_forward.5} parent=5 // pred_check_branch
      %157 = sbr.rel (%p155) target = $region20
    $region19: #{discriminator_forward.5} parent=5 // pred_region
      // Predicated region
      $region21: #{discriminator_forward.5} parent=19 // pred_check
        %p158 = pneg %p31
      $region22: #{discriminator_forward.5} parent=19 // pred_check_branch
        %160 = sbr.rel (%p158) target = $region24
      $region23: #{discriminator_forward.5} parent=19 // pred_region
        %s161 = smul.u32 2, %s11
        %p162 = scmp.lt.s32.totalorder %s161, 3
        %s163 = scalar_select %p162, %s161, 3
        %s164 = smul.addr %s163, 4
        %s165 = scalar_lea.vmem %s0, %s164
        %s166 = smul.u32 2, %s11
      $region24: #{discriminator_forward.5} parent=19 // pred_fallthru
        _
    $region20: #{discriminator_forward.5} parent=5 // pred_fallthru
      _
    %p167 = scmp.le.s32.totalorder 1, %s11
    %p168 = scmp.lt.s32.totalorder %s11, 3
    %p169 = pnand %p167, %p168
    %p170 = pneg %p169
    // Predicated region
    $region25: #{discriminator_forward.5} parent=5 // pred_check
      _
    $region26: #{discriminator_forward.5} parent=5 // pred_check_branch
      %172 = sbr.rel (%p169) target = $region28
    $region27: #{discriminator_forward.5} parent=5 // pred_region
      %s173 = ssub.s32 %s11, 1
      %s174 = smul.u32 2, %s16
      %p175 = scmp.lt.s32.totalorder %s174, 3
      %s176 = scalar_select %p175, %s174, 3
      %s177 = smul.addr %s176, 4
      %s178 = scalar_lea.vmem %s0, %s177
      %p179 = pneg %p37
      %p180 = pneg %p34
      %p181 = pneg %p58
      %p182 = pneg %p55
      %p183 = pneg %p84
      %p184 = pneg %p81
      %s185 = smul.u32 2, %s16
      %p186 = scmp.lt.s32.totalorder %s185, 3
      %s187 = scalar_select %p186, %s185, 3
      %s188 = smul.addr %s187, 4
      %s189 = scalar_lea.vmem %s2, %s188
      %p190 = pneg %p110
      %p191 = pneg %p107
      %p192 = scmp.lt.s32.totalorder %s16, 1
      %s193 = scalar_select %p192, %s16, 1
      %s194 = scalar_lea.vmem %s3, %s193
      %p195 = pneg %p136
      %p196 = pneg %p133
      %p197 = scmp.lt.s32.totalorder %s16, 1
      %s198 = scalar_select %p197, %s16, 1
      %s199 = scalar_lea.vmem %s4, %s198
      %s200 = smul.u32 2, %s16
      %p201 = scmp.lt.s32.totalorder %s200, 3
      %s202 = scalar_select %p201, %s200, 3
      %s203 = smul.addr %s202, 4
      %s204 = scalar_lea.vmem %s0, %s203
      %s205 = smul.u32 2, %s16
      %s206 = smul.u32 2, %s16
      %p207 = scmp.lt.s32.totalorder %s206, 3
      %s208 = scalar_select %p207, %s206, 3
      %s209 = smul.addr %s208, 4
      %s210 = scalar_lea.vmem %s2, %s209
      %s211 = smul.u32 2, %s16
      %p212 = scmp.lt.s32.totalorder %s16, 1
      %s213 = scalar_select %p212, %s16, 1
      %s214 = scalar_lea.vmem %s3, %s213
      %p215 = scmp.lt.s32.totalorder %s16, 1
      %s216 = scalar_select %p215, %s16, 1
      %s217 = scalar_lea.vmem %s4, %s216
      %v219 = vld [vmem:[%s204] sm:$0xf]
      %v220 = vld [vmem:[%s204 + $0x4] sm:$0xf]
      %v221 = vld [vmem:[%s1] sm:$0xf]
      %v222 = vld [vmem:[%s1 + $0x4] sm:$0xf]
      %v223 = vld [vmem:[%s1 + $0x8] sm:$0xf]
      %v224 = vld [vmem:[%s1 + $0xc] sm:$0xf]
      %v225 = vld [vmem:[%s1 + $0x10] sm:$0xf]
      %v226 = vld [vmem:[%s1 + $0x14] sm:$0xf]
      %v227 = vld [vmem:[%s1 + $0x18] sm:$0xf]
      %v228 = vld [vmem:[%s1 + $0x1c] sm:$0xf]
      %v229 = vld [vmem:[%s1 + $0x20] sm:$0xf]
      %v230 = vld [vmem:[%s1 + $0x24] sm:$0xf]
      %v231 = vld [vmem:[%s1 + $0x28] sm:$0xf]
      %v232 = vld [vmem:[%s1 + $0x2c] sm:$0xf]
      %v233 = vld [vmem:[%s1 + $0x30] sm:$0xf]
      %v234 = vld [vmem:[%s1 + $0x34] sm:$0xf]
      %v235 = vld [vmem:[%s1 + $0x38] sm:$0xf]
      %v236 = vld [vmem:[%s1 + $0x3c] sm:$0xf]
      %v239 = vunpack.c.l.b16 %v219
      %v240 = vunpack.c.l.b16 %v220
      %v241 = vpack.c.b16 %v240, %v239
      %v259 = vunpack.c.l.b16 %v221
      %v260 = vunpack.c.l.b16 %v222
      %v261 = vunpack.c.l.b16 %v223
      %v262 = vunpack.c.l.b16 %v224
      %v263 = vunpack.c.l.b16 %v225
      %v264 = vunpack.c.l.b16 %v226
      %v265 = vunpack.c.l.b16 %v227
      %v266 = vunpack.c.l.b16 %v228
      %v267 = vunpack.c.l.b16 %v229
      %v268 = vunpack.c.l.b16 %v230
      %v269 = vunpack.c.l.b16 %v231
      %v270 = vunpack.c.l.b16 %v232
      %v271 = vunpack.c.l.b16 %v233
      %v272 = vunpack.c.l.b16 %v234
      %v273 = vunpack.c.l.b16 %v235
      %v274 = vunpack.c.l.b16 %v236
      %v275 = vpack.c.b16 %v260, %v259
      %v276 = vpack.c.b16 %v262, %v261
      %v277 = vpack.c.b16 %v264, %v263
      %v278 = vpack.c.b16 %v266, %v265
      %v279 = vpack.c.b16 %v268, %v267
      %v280 = vpack.c.b16 %v270, %v269
      %v281 = vpack.c.b16 %v272, %v271
      %v282 = vpack.c.b16 %v274, %v273
      %291 = vmatprep.subr.bf16.mxu0 0
      %292 = vmatpush1.bf16.msra.mxu0 %v275
      %293 = vmatprep.subr.bf16.mxu0 0
      %294 = vmatpush1.bf16.msra.mxu0 %v276
      %295 = vmatprep.subr.bf16.mxu0 0
      %296 = vmatpush1.bf16.msra.mxu0 %v277
      %297 = vmatprep.subr.bf16.mxu0 0
      %298 = vmatpush1.bf16.msra.mxu0 %v278
      %299 = vmatprep.subr.bf16.mxu0 0
      %300 = vmatpush1.bf16.msra.mxu0 %v279
      %301 = vmatprep.subr.bf16.mxu0 0
      %302 = vmatpush1.bf16.msra.mxu0 %v280
      %303 = vmatprep.subr.bf16.mxu0 0
      %304 = vmatpush1.bf16.msra.mxu0 %v281
      %305 = vmatprep.subr.bf16.mxu0 0
      %306 = vmatpush1.bf16.msra.mxu0 %v282
      %307 = vmatprep.subr.bf16.mxu0 0
      %308 = vmatpush1.bf16.msra.mxu0 0
      %309 = vmatprep.subr.bf16.mxu0 0
      %310 = vmatpush1.bf16.msra.mxu0 0
      %311 = vmatprep.subr.bf16.mxu0 0
      %312 = vmatpush1.bf16.msra.mxu0 0
      %313 = vmatprep.subr.bf16.mxu0 0
      %314 = vmatpush1.bf16.msra.mxu0 0
      %315 = vmatprep.subr.bf16.mxu0 0
      %316 = vmatpush1.bf16.msra.mxu0 0
      %317 = vmatprep.subr.bf16.mxu0 0
      %318 = vmatpush1.bf16.msra.mxu0 0
      %319 = vmatprep.subr.bf16.mxu0 0
      %320 = vmatpush1.bf16.msra.mxu0 0
      %321 = vmatprep.subr.bf16.mxu0 0
      %322 = vmatpush1.bf16.msra.mxu0 0
      %323 = vmatprep.mubr.bf16.mxu0 0
      %324 = vmatmul.mubr.bf16.gmra.mrb[0].mxu0 %v241
      %v325 = vpop.f32.mrb[0].mxu0
      %v326 = vadd.f32 0.0, %v325
      %v327 = vpop.f32.mrb[0].mxu0
      %v328 = vpop.f32.mrb[0].mxu0
      %v329 = vadd.f32 0.0, %v328
      %v330 = vpop.f32.mrb[0].mxu0
      %331 = vdwg.mxu0
      %v332 = vpack.c.bf16 %v329, %v326
      %v334 = vunpack.c.l.b16 %v332
      %v335 = vunpack.c.h.b16 %v332
      %v336 = vpack.c.b16 %v334, %v334
      %v337 = vpack.c.b16 %v335, %v335
      %340 = vst [vmem:[%s210] sm:$0xf] %v336
      %341 = vst [vmem:[%s210 + $0x4] sm:$0xf] %v337
      %v342 = vadd.f32 %v326, %v329
      %v343 = vrot.slane %v342, 4
      %v344 = vadd.f32 %v342, %v343
      %v345 = vrot.slane %v344, 2
      %v346 = vadd.f32 %v344, %v345
      %v347 = vrot.slane %v346, 1
      %v348 = vadd.f32 %v346, %v347
      %349 = vst [vmem:[%s214] sm:$0x1] %v348
      %v350 = vmul.f32 %v326, %v326
      %v351 = vmul.f32 %v329, %v329
      %v352 = vadd.f32 %v350, %v351
      %v353 = vrot.slane %v352, 4
      %v354 = vadd.f32 %v352, %v353
      %v355 = vrot.slane %v354, 2
      %v356 = vadd.f32 %v354, %v355
      %v357 = vrot.slane %v356, 1
      %v358 = vadd.f32 %v356, %v357
      %359 = vst [vmem:[%s217] sm:$0x1] %v358
      %s360 = smul.u32 2, %s16
      %p361 = scmp.lt.s32.totalorder %s360, 3
      %s362 = scalar_select %p361, %s360, 3
      %s363 = smul.addr %s362, 4
      %s364 = scalar_lea.vmem %s2, %s363
      %p365 = scmp.lt.s32.totalorder %s16, 1
      %s366 = scalar_select %p365, %s16, 1
      %s367 = scalar_lea.vmem %s3, %s366
      %p368 = scmp.lt.s32.totalorder %s16, 1
      %s369 = scalar_select %p368, %s16, 1
      %s370 = scalar_lea.vmem %s4, %s369
      // Predicated region
      $region29: #{discriminator_forward.5} parent=27 // pred_check
        %p371 = pneg %p81
      $region30: #{discriminator_forward.5} parent=27 // pred_check_branch
        %373 = sbr.rel (%p371) target = $region32
      $region31: #{discriminator_forward.5} parent=27 // pred_region
        %s374 = smul.u32 2, %s16
      $region32: #{discriminator_forward.5} parent=27 // pred_fallthru
        _
      // Predicated region
      $region33: #{discriminator_forward.5} parent=27 // pred_check
        %p375 = pneg %p107
      $region34: #{discriminator_forward.5} parent=27 // pred_check_branch
        %377 = sbr.rel (%p375) target = $region36
      $region35: #{discriminator_forward.5} parent=27 // pred_region
        _
      $region36: #{discriminator_forward.5} parent=27 // pred_fallthru
        _
      // Predicated region
      $region37: #{discriminator_forward.5} parent=27 // pred_check
        %p378 = pneg %p133
      $region38: #{discriminator_forward.5} parent=27 // pred_check_branch
        %380 = sbr.rel (%p378) target = $region40
      $region39: #{discriminator_forward.5} parent=27 // pred_region
        _
      $region40: #{discriminator_forward.5} parent=27 // pred_fallthru
        _
    $region28: #{discriminator_forward.5} parent=5 // pred_fallthru
      _
    %p381 = scmp.le.s32.totalorder 2, %s11
    // Predicated region
    $region41: #{discriminator_forward.5} parent=5 // pred_check
      %p382 = pneg %p381
    $region42: #{discriminator_forward.5} parent=5 // pred_check_branch
      %384 = sbr.rel (%p382) target = $region44
    $region43: #{discriminator_forward.5} parent=5 // pred_region
      %s385 = ssub.s32 %s11, 2
      // Predicated region
      $region45: #{discriminator_forward.5} parent=43 // pred_check
        %p386 = pneg %p87
      $region46: #{discriminator_forward.5} parent=43 // pred_check_branch
        %388 = sbr.rel (%p386) target = $region48
      $region47: #{discriminator_forward.5} parent=43 // pred_region
        %s389 = smul.u32 2, %s17
        %p390 = scmp.lt.s32.totalorder %s389, 3
        %s391 = scalar_select %p390, %s389, 3
        %s392 = smul.addr %s391, 4
        %s393 = scalar_lea.vmem %s2, %s392
      $region48: #{discriminator_forward.5} parent=43 // pred_fallthru
        _
      // Predicated region
      $region49: #{discriminator_forward.5} parent=43 // pred_check
        %p394 = pneg %p113
      $region50: #{discriminator_forward.5} parent=43 // pred_check_branch
        %396 = sbr.rel (%p394) target = $region52
      $region51: #{discriminator_forward.5} parent=43 // pred_region
        %p397 = scmp.lt.s32.totalorder %s17, 1
        %s398 = scalar_select %p397, %s17, 1
        %s399 = scalar_lea.vmem %s3, %s398
      $region52: #{discriminator_forward.5} parent=43 // pred_fallthru
        _
      // Predicated region
      $region53: #{discriminator_forward.5} parent=43 // pred_check
        %p400 = pneg %p139
      $region54: #{discriminator_forward.5} parent=43 // pred_check_branch
        %402 = sbr.rel (%p400) target = $region56
      $region55: #{discriminator_forward.5} parent=43 // pred_region
        %p403 = scmp.lt.s32.totalorder %s17, 1
        %s404 = scalar_select %p403, %s17, 1
        %s405 = scalar_lea.vmem %s4, %s404
      $region56: #{discriminator_forward.5} parent=43 // pred_fallthru
        _
    $region44: #{discriminator_forward.5} parent=5 // pred_fallthru
      _
  $region6: #{discriminator_forward.5} parent=0 // loop_footer
    %s15 = sadd.s32 1, %s11
  $region7: #{discriminator_forward.5} parent=0 // loop_footer_branch
    %10 = sbr.rel target = $region3
  $region8: #{discriminator_forward.5} parent=0 // loop_exit
    _

// kernel: tile.13
$region0: #{tile.13}
  #allocation0 [shape = 's32[1]{0}', space=sflag, size = 0x4, scoped, tag = 'scoped memory for tile.13']
  %s0 = inlined_call_operand.vmem [shape: f32[16], index: 0, kind: input, shape index: {}]
  %s1 = inlined_call_operand.vmem [shape: f32[16,16], index: 1, kind: output, shape index: {}]
  // Predicated region
  $region2: #{tile.13} parent=0 // pred_check
    _
  $region3: #{tile.13} parent=0 // pred_check_branch
    %3 = sbr.rel (0) target = $region5
  $region4: #{tile.13} parent=0 // pred_region
    _
  $region5: #{tile.13} parent=0 // pred_fallthru
    _
  %v4 = vld [vmem:[%s0] ss:$0 sm:$0xff]
  %5 = vst [vmem:[%s1] sm:$0xff] %v4
  %s6 = scalar_lea.vmem %s1, 8
  %7 = vst [vmem:[%s6] sm:$0xff] %v4

// kernel: discriminator_forward.6
$region0: #{discriminator_forward.6}
  #allocation0 [shape = 'u32[]', space=smem, size = 0x4, offset = 0x4, fixed_abs, tag = 'smem constant byte address 0x4 - core index']
  #allocation1 [shape = 'u32[144,128]{1,0:T(1,128)}', space=vmem, size = 0x12000, scoped, tag = 'internal scratch']
  %s0 = inlined_call_operand.vmem [shape: bf16[8,256], index: 0, kind: input, shape index: {}]
  %s1 = inlined_call_operand.vmem [shape: f32[1,256], index: 1, kind: input, shape index: {}]
  %s2 = inlined_call_operand.vmem [shape: f32[1,256], index: 2, kind: input, shape index: {}]
  %s3 = inlined_call_operand.vmem [shape: bf16[256,128], index: 3, kind: input, shape index: {}]
  %s4 = inlined_call_operand.vmem [shape: bf16[8,128], index: 4, kind: output, shape index: {0}]
  %s5 = inlined_call_operand.vmem [shape: f32[1,1,128], index: 5, kind: output, shape index: {1}]
  %s6 = inlined_call_operand.vmem [shape: f32[1,1,128], index: 6, kind: output, shape index: {2}]
  %7 = xla_tuple %s4, %s5, %s6
  %s8 = sld [smem:[#allocation0]]
  $region42: #{discriminator_forward.6} parent=0
    _
  %s10 = ssub.s32 1, %s8
  %s11 = scalar_select 0, %s10, %s8
  // Predicated region
  $region2: #{discriminator_forward.6} parent=0 // pred_check
    _
  $region3: #{discriminator_forward.6} parent=0 // pred_check_branch
    %13 = sbr.rel (0) target = $region5
  $region4: #{discriminator_forward.6} parent=0 // pred_region
    _
  $region5: #{discriminator_forward.6} parent=0 // pred_fallthru
    _
  // Predicated region
  $region6: #{discriminator_forward.6} parent=0 // pred_check
    _
  $region7: #{discriminator_forward.6} parent=0 // pred_check_branch
    %15 = sbr.rel (0) target = $region9
  $region8: #{discriminator_forward.6} parent=0 // pred_region
    _
  $region9: #{discriminator_forward.6} parent=0 // pred_fallthru
    _
  // Predicated region
  $region10: #{discriminator_forward.6} parent=0 // pred_check
    _
  $region11: #{discriminator_forward.6} parent=0 // pred_check_branch
    %17 = sbr.rel (0) target = $region13
  $region12: #{discriminator_forward.6} parent=0 // pred_region
    _
  $region13: #{discriminator_forward.6} parent=0 // pred_fallthru
    _
  // Predicated region
  $region14: #{discriminator_forward.6} parent=0 // pred_check
    _
  $region15: #{discriminator_forward.6} parent=0 // pred_check_branch
    %19 = sbr.rel (0) target = $region17
  $region16: #{discriminator_forward.6} parent=0 // pred_region
    _
  $region17: #{discriminator_forward.6} parent=0 // pred_fallthru
    _
  %v21 = vld [vmem:[%s0] sm:$0xff]
  %v22 = vunpack.c.l.bf16 %v21
  %v23 = vunpack.c.h.bf16 %v21
  %v24 = vld [vmem:[%s1] sm:$0x3]
  %v26 = vlaneseq
  %v27 = vshrl.u32 %v26, 7
  %v28 = vsub.s32 0, %v27
  %v29 = vrot.slane %v24, %v28
  %v30 = vlaneseq
  %v31 = vshrl.u32 %v30, 7
  %v32 = vsub.s32 1, %v31
  %v33 = vrot.slane %v24, %v32
  %v36 = vmul.f32 %v22, %v29
  %v37 = vmul.f32 %v23, %v33
  %v38 = vld [vmem:[%s2] sm:$0x3]
  %v40 = vlaneseq
  %v41 = vshrl.u32 %v40, 7
  %v42 = vsub.s32 0, %v41
  %v43 = vrot.slane %v38, %v42
  %v44 = vlaneseq
  %v45 = vshrl.u32 %v44, 7
  %v46 = vsub.s32 1, %v45
  %v47 = vrot.slane %v38, %v46
  %v50 = vadd.f32 %v36, %v43
  %v51 = vadd.f32 %v37, %v47
  %vm52 = vcmp.ge.f32.partialorder %v50, 0.0
  %vm53 = vcmp.ge.f32.partialorder %v51, 0.0
  %v54 = vmul.f32 %v50, 0.2
  %v55 = vmul.f32 %v51, 0.2
  %v56 = vsel %vm52, %v50, %v54
  %v57 = vsel %vm53, %v51, %v55
  %s58 = smul.u32 0, 8
  %v59 = vlaneseq
  %v60 = vshrl.u32 %v59, 7
  %v61 = vstv %s58
  %v62 = vadd.s32 %v61, %v60
  %vm63 = vcmp.lt.s32.totalorder %v62, 8
  %v64 = vsel %vm63, 1, 0
  %vm65 = vcmp.eq.s32.totalorder %v64, 1
  %v66 = vsel %vm65, %v56, 0.0
  %v67 = vsel %vm65, %v57, 0.0
  %v68 = vpack.c.bf16 %v66, %v66
  %v69 = vpack.c.bf16 %v67, %v67
  %v70 = vld [vmem:[%s3] sm:$0xf]
  %v71 = vld [vmem:[%s3 + $0x4] sm:$0xf]
  %v72 = vld [vmem:[%s3 + $0x8] sm:$0xf]
  %v73 = vld [vmem:[%s3 + $0xc] sm:$0xf]
  %v74 = vld [vmem:[%s3 + $0x10] sm:$0xf]
  %v75 = vld [vmem:[%s3 + $0x14] sm:$0xf]
  %v76 = vld [vmem:[%s3 + $0x18] sm:$0xf]
  %v77 = vld [vmem:[%s3 + $0x1c] sm:$0xf]
  %v78 = vld [vmem:[%s3 + $0x20] sm:$0xf]
  %v79 = vld [vmem:[%s3 + $0x24] sm:$0xf]
  %v80 = vld [vmem:[%s3 + $0x28] sm:$0xf]
  %v81 = vld [vmem:[%s3 + $0x2c] sm:$0xf]
  %v82 = vld [vmem:[%s3 + $0x30] sm:$0xf]
  %v83 = vld [vmem:[%s3 + $0x34] sm:$0xf]
  %v84 = vld [vmem:[%s3 + $0x38] sm:$0xf]
  %v85 = vld [vmem:[%s3 + $0x3c] sm:$0xf]
  %v86 = vld [vmem:[%s3 + $0x40] sm:$0xf]
  %v87 = vld [vmem:[%s3 + $0x44] sm:$0xf]
  %v88 = vld [vmem:[%s3 + $0x48] sm:$0xf]
  %v89 = vld [vmem:[%s3 + $0x4c] sm:$0xf]
  %v90 = vld [vmem:[%s3 + $0x50] sm:$0xf]
  %v91 = vld [vmem:[%s3 + $0x54] sm:$0xf]
  %v92 = vld [vmem:[%s3 + $0x58] sm:$0xf]
  %v93 = vld [vmem:[%s3 + $0x5c] sm:$0xf]
  %v94 = vld [vmem:[%s3 + $0x60] sm:$0xf]
  %v95 = vld [vmem:[%s3 + $0x64] sm:$0xf]
  %v96 = vld [vmem:[%s3 + $0x68] sm:$0xf]
  %v97 = vld [vmem:[%s3 + $0x6c] sm:$0xf]
  %v98 = vld [vmem:[%s3 + $0x70] sm:$0xf]
  %v99 = vld [vmem:[%s3 + $0x74] sm:$0xf]
  %v100 = vld [vmem:[%s3 + $0x78] sm:$0xf]
  %v101 = vld [vmem:[%s3 + $0x7c] sm:$0xf]
  %v134 = vunpack.c.l.b16 %v70
  %v135 = vunpack.c.l.b16 %v71
  %v136 = vunpack.c.l.b16 %v72
  %v137 = vunpack.c.l.b16 %v73
  %v138 = vunpack.c.l.b16 %v74
  %v139 = vunpack.c.l.b16 %v75
  %v140 = vunpack.c.l.b16 %v76
  %v141 = vunpack.c.l.b16 %v77
  %v142 = vunpack.c.l.b16 %v78
  %v143 = vunpack.c.l.b16 %v79
  %v144 = vunpack.c.l.b16 %v80
  %v145 = vunpack.c.l.b16 %v81
  %v146 = vunpack.c.l.b16 %v82
  %v147 = vunpack.c.l.b16 %v83
  %v148 = vunpack.c.l.b16 %v84
  %v149 = vunpack.c.l.b16 %v85
  %v150 = vunpack.c.l.b16 %v86
  %v151 = vunpack.c.l.b16 %v87
  %v152 = vunpack.c.l.b16 %v88
  %v153 = vunpack.c.l.b16 %v89
  %v154 = vunpack.c.l.b16 %v90
  %v155 = vunpack.c.l.b16 %v91
  %v156 = vunpack.c.l.b16 %v92
  %v157 = vunpack.c.l.b16 %v93
  %v158 = vunpack.c.l.b16 %v94
  %v159 = vunpack.c.l.b16 %v95
  %v160 = vunpack.c.l.b16 %v96
  %v161 = vunpack.c.l.b16 %v97
  %v162 = vunpack.c.l.b16 %v98
  %v163 = vunpack.c.l.b16 %v99
  %v164 = vunpack.c.l.b16 %v100
  %v165 = vunpack.c.l.b16 %v101
  %v166 = vpack.c.b16 %v135, %v134
  %v167 = vpack.c.b16 %v137, %v136
  %v168 = vpack.c.b16 %v139, %v138
  %v169 = vpack.c.b16 %v141, %v140
  %v170 = vpack.c.b16 %v143, %v142
  %v171 = vpack.c.b16 %v145, %v144
  %v172 = vpack.c.b16 %v147, %v146
  %v173 = vpack.c.b16 %v149, %v148
  %v174 = vpack.c.b16 %v151, %v150
  %v175 = vpack.c.b16 %v153, %v152
  %v176 = vpack.c.b16 %v155, %v154
  %v177 = vpack.c.b16 %v157, %v156
  %v178 = vpack.c.b16 %v159, %v158
  %v179 = vpack.c.b16 %v161, %v160
  %v180 = vpack.c.b16 %v163, %v162
  %v181 = vpack.c.b16 %v165, %v164
  %198 = vmatprep.subr.bf16.mxu0 0
  %199 = vmatpush1.bf16.msra.mxu0 %v166
  %200 = vmatprep.subr.bf16.mxu0 0
  %201 = vmatpush1.bf16.msra.mxu0 %v167
  %202 = vmatprep.subr.bf16.mxu0 0
  %203 = vmatpush1.bf16.msra.mxu0 %v168
  %204 = vmatprep.subr.bf16.mxu0 0
  %205 = vmatpush1.bf16.msra.mxu0 %v169
  %206 = vmatprep.subr.bf16.mxu0 0
  %207 = vmatpush1.bf16.msra.mxu0 %v170
  %208 = vmatprep.subr.bf16.mxu0 0
  %209 = vmatpush1.bf16.msra.mxu0 %v171
  %210 = vmatprep.subr.bf16.mxu0 0
  %211 = vmatpush1.bf16.msra.mxu0 %v172
  %212 = vmatprep.subr.bf16.mxu0 0
  %213 = vmatpush1.bf16.msra.mxu0 %v173
  %214 = vmatprep.subr.bf16.mxu0 0
  %215 = vmatpush1.bf16.msra.mxu0 %v174
  %216 = vmatprep.subr.bf16.mxu0 0
  %217 = vmatpush1.bf16.msra.mxu0 %v175
  %218 = vmatprep.subr.bf16.mxu0 0
  %219 = vmatpush1.bf16.msra.mxu0 %v176
  %220 = vmatprep.subr.bf16.mxu0 0
  %221 = vmatpush1.bf16.msra.mxu0 %v177
  %222 = vmatprep.subr.bf16.mxu0 0
  %223 = vmatpush1.bf16.msra.mxu0 %v178
  %224 = vmatprep.subr.bf16.mxu0 0
  %225 = vmatpush1.bf16.msra.mxu0 %v179
  %226 = vmatprep.subr.bf16.mxu0 0
  %227 = vmatpush1.bf16.msra.mxu0 %v180
  %228 = vmatprep.subr.bf16.mxu0 0
  %229 = vmatpush1.bf16.msra.mxu0 %v181
  %230 = vmatprep.mubr.bf16.mxu0 %v69
  %231 = vmatmul.mubr.bf16.gmra.mrb[0].mxu0 %v68
  %v232 = vpop.f32.mrb[0].mxu0
  %v233 = vadd.f32 0.0, %v232
  %v234 = vpop.f32.mrb[0].mxu0
  %v235 = vpop.f32.mrb[0].mxu0
  %v236 = vpop.f32.mrb[0].mxu0
  %237 = vdwg.mxu0
  %v238 = vpack.c.bf16 %v233, %v233
  %239 = vst [vmem:[%s4] sm:$0xf] %v238
  %v240 = vrot.slane %v233, 4
  %v241 = vadd.f32 %v233, %v240
  %v242 = vrot.slane %v241, 2
  %v243 = vadd.f32 %v241, %v242
  %v244 = vrot.slane %v243, 1
  %v245 = vadd.f32 %v243, %v244
  %246 = vst [vmem:[%s5] sm:$0x1] %v245
  %v247 = vmul.f32 %v233, %v233
  %v248 = vrot.slane %v247, 4
  %v249 = vadd.f32 %v247, %v248
  %v250 = vrot.slane %v249, 2
  %v251 = vadd.f32 %v249, %v250
  %v252 = vrot.slane %v251, 1
  %v253 = vadd.f32 %v251, %v252
  %254 = vst [vmem:[%s6] sm:$0x1] %v253
  // Predicated region
  $region18: #{discriminator_forward.6} parent=0 // pred_check
    _
  $region19: #{discriminator_forward.6} parent=0 // pred_check_branch
    %256 = sbr.rel (0) target = $region21
  $region20: #{discriminator_forward.6} parent=0 // pred_region
    _
  $region21: #{discriminator_forward.6} parent=0 // pred_fallthru
    _
  // Predicated region
  $region22: #{discriminator_forward.6} parent=0 // pred_check
    _
  $region23: #{discriminator_forward.6} parent=0 // pred_check_branch
    %258 = sbr.rel (0) target = $region25
  $region24: #{discriminator_forward.6} parent=0 // pred_region
    _
  $region25: #{discriminator_forward.6} parent=0 // pred_fallthru
    _
  // Predicated region
  $region26: #{discriminator_forward.6} parent=0 // pred_check
    _
  $region27: #{discriminator_forward.6} parent=0 // pred_check_branch
    %260 = sbr.rel (0) target = $region29
  $region28: #{discriminator_forward.6} parent=0 // pred_region
    _
  $region29: #{discriminator_forward.6} parent=0 // pred_fallthru
    _
  // Predicated region
  $region30: #{discriminator_forward.6} parent=0 // pred_check
    _
  $region31: #{discriminator_forward.6} parent=0 // pred_check_branch
    %262 = sbr.rel (0) target = $region33
  $region32: #{discriminator_forward.6} parent=0 // pred_region
    _
  $region33: #{discriminator_forward.6} parent=0 // pred_fallthru
    _
  // Predicated region
  $region34: #{discriminator_forward.6} parent=0 // pred_check
    _
  $region35: #{discriminator_forward.6} parent=0 // pred_check_branch
    %264 = sbr.rel (0) target = $region37
  $region36: #{discriminator_forward.6} parent=0 // pred_region
    _
  $region37: #{discriminator_forward.6} parent=0 // pred_fallthru
    _
  // Predicated region
  $region38: #{discriminator_forward.6} parent=0 // pred_check
    _
  $region39: #{discriminator_forward.6} parent=0 // pred_check_branch
    %266 = sbr.rel (0) target = $region41
  $region40: #{discriminator_forward.6} parent=0 // pred_region
    _
  $region41: #{discriminator_forward.6} parent=0 // pred_fallthru
    _

// kernel: discriminator_forward.7
$region0: #{discriminator_forward.7}
  #allocation0 [shape = 'u32[]', space=smem, size = 0x4, offset = 0x4, fixed_abs, tag = 'smem constant byte address 0x4 - core index']
  #allocation1 [shape = 'u32[144,128]{1,0:T(1,128)}', space=vmem, size = 0x12000, scoped, tag = 'internal scratch']
  %s0 = inlined_call_operand.vmem [shape: bf16[2,8,128], index: 0, kind: input, shape index: {}]
  %s1 = inlined_call_operand.vmem [shape: f32[1,128], index: 1, kind: input, shape index: {}]
  %s2 = inlined_call_operand.vmem [shape: f32[1,128], index: 2, kind: input, shape index: {}]
  %s3 = inlined_call_operand.vmem [shape: f32[8,9], index: 3, kind: input, shape index: {}]
  %s4 = inlined_call_operand.vmem [shape: f32[2,1,9,128], index: 4, kind: output, shape index: {}]
  %s5 = sld [smem:[#allocation0]]
  $region49: #{discriminator_forward.7} parent=0
    _
  %s7 = ssub.s32 1, %s5
  %s8 = scalar_select 0, %s7, %s5
  loop: start=0, step=1, limit=4
  $region2: #{discriminator_forward.7} parent=0 // loop_pre_header
    _
  $region3: #{discriminator_forward.7} parent=0 // loop_header
    %s10 = sphi 0, %s14
    %p11 = scmp.ge.s32.totalorder %s10, 4
    %s17 = sphi 0, %s29
    %s18 = sphi 0, %s25
    %s19 = sphi 0, %s17
    %s20 = sphi 0, %s18
    %s21 = sphi 0, %s19
    %s22 = sphi 0, %s20
    %s34 = sphi 0, %s36
    %s37 = sphi 0, %s34
    %s38 = sphi 0, %s37
    %s54 = sphi 0, %s38
    %s58 = sphi 0, %s58
    %s60 = sphi 0, %s58
    %s61 = sphi 0, %s60
    %s75 = sphi 0, %s61
    %s79 = sphi 0, %s79
    %s81 = sphi 0, %s79
    %s82 = sphi 0, %s81
    %s96 = sphi 0, %s82
    %s102 = sphi 0, %s104
    %s105 = sphi 0, %s102
    %s106 = sphi 0, %s105
    %s122 = sphi 0, %s106
    %s130 = sphi 0, %s132
    %s133 = sphi 0, %s130
    %s134 = sphi 0, %s133
    %s150 = sphi 0, %s134
  $region4: #{discriminator_forward.7} parent=0 // loop_header_branch
    %13 = sbr.rel (%p11) target = $region8
  $region5: #{discriminator_forward.7} parent=0 // loop_body
    %s15 = ssub.s32 %s10, 1
    %s16 = ssub.s32 %s10, 2
    %s23 = sadd.s32 1, %s18
    %p24 = scmp.ge.s32.totalorder %s23, 1
    %s25 = scalar_select %p24, 0, %s23
    %s26 = sadd.s32 1, %s17
    %s27 = scalar_select %p24, %s26, %s17
    %p28 = scmp.ge.s32.totalorder %s27, 2
    %s29 = scalar_select %p28, 0, %s27
    %s30 = ssub.s32 %s17, %s29
    %s31 = ssub.s32 %s18, %s25
    %s32 = sor.u32 %s30, %s31
    %p33 = scmp.eq.s32.totalorder %s32, 0
    %s35 = sadd.s32 %s34, 1
    %s36 = scalar_select %p33, %s34, %s35
    %p39 = pneg %p33
    %p40 = scmp.eq.s32.totalorder %s10, 1
    %p41 = por %p39, %p40
    %p42 = scmp.ne.s32.totalorder %s34, %s37
    %p43 = scmp.eq.s32.totalorder %s10, 0
    %p44 = por %p42, %p43
    %p45 = scmp.ne.s32.totalorder %s34, %s37
    %p46 = scmp.eq.s32.totalorder %s15, 1
    %p47 = por %p45, %p46
    %p48 = scmp.ne.s32.totalorder %s37, %s38
    %p49 = scmp.eq.s32.totalorder %s15, 0
    %p50 = por %p48, %p49
    %p51 = scmp.ne.s32.totalorder %s37, %s38
    %p52 = scmp.eq.s32.totalorder %s16, 1
    %p53 = por %p51, %p52
    %p55 = scmp.ne.s32.totalorder %s38, %s54
    %p56 = scmp.eq.s32.totalorder %s16, 0
    %p57 = por %p55, %p56
    %s59 = sadd.s32 %s58, 1
    %p62 = scmp.eq.s32.totalorder %s10, 1
    %p63 = scmp.ne.s32.totalorder %s58, %s60
    %p64 = scmp.eq.s32.totalorder %s10, 0
    %p65 = por %p63, %p64
    %p66 = scmp.ne.s32.totalorder %s58, %s60
    %p67 = scmp.eq.s32.totalorder %s15, 1
    %p68 = por %p66, %p67
    %p69 = scmp.ne.s32.totalorder %s60, %s61
    %p70 = scmp.eq.s32.totalorder %s15, 0
    %p71 = por %p69, %p70
    %p72 = scmp.ne.s32.totalorder %s60, %s61
    %p73 = scmp.eq.s32.totalorder %s16, 1
    %p74 = por %p72, %p73
    %p76 = scmp.ne.s32.totalorder %s61, %s75
    %p77 = scmp.eq.s32.totalorder %s16, 0
    %p78 = por %p76, %p77
    %s80 = sadd.s32 %s79, 1
    %p83 = scmp.eq.s32.totalorder %s10, 1
    %p84 = scmp.ne.s32.totalorder %s79, %s81
    %p85 = scmp.eq.s32.totalorder %s10, 0
    %p86 = por %p84, %p85
    %p87 = scmp.ne.s32.totalorder %s79, %s81
    %p88 = scmp.eq.s32.totalorder %s15, 1
    %p89 = por %p87, %p88
    %p90 = scmp.ne.s32.totalorder %s81, %s82
    %p91 = scmp.eq.s32.totalorder %s15, 0
    %p92 = por %p90, %p91
    %p93 = scmp.ne.s32.totalorder %s81, %s82
    %p94 = scmp.eq.s32.totalorder %s16, 1
    %p95 = por %p93, %p94
    %p97 = scmp.ne.s32.totalorder %s82, %s96
    %p98 = scmp.eq.s32.totalorder %s16, 0
    %p99 = por %p97, %p98
    %s100 = ssub.s32 %s18, %s25
    %p101 = scmp.eq.s32.totalorder %s100, 0
    %s103 = sadd.s32 %s102, 1
    %s104 = scalar_select %p101, %s102, %s103
    %p107 = pneg %p101
    %p108 = scmp.eq.s32.totalorder %s10, 1
    %p109 = por %p107, %p108
    %p110 = scmp.ne.s32.totalorder %s102, %s105
    %p111 = scmp.eq.s32.totalorder %s10, 0
    %p112 = por %p110, %p111
    %p113 = scmp.ne.s32.totalorder %s102, %s105
    %p114 = scmp.eq.s32.totalorder %s15, 1
    %p115 = por %p113, %p114
    %p116 = scmp.ne.s32.totalorder %s105, %s106
    %p117 = scmp.eq.s32.totalorder %s15, 0
    %p118 = por %p116, %p117
    %p119 = scmp.ne.s32.totalorder %s105, %s106
    %p120 = scmp.eq.s32.totalorder %s16, 1
    %p121 = por %p119, %p120
    %p123 = scmp.ne.s32.totalorder %s106, %s122
    %p124 = scmp.eq.s32.totalorder %s16, 0
    %p125 = por %p123, %p124
    %s126 = ssub.s32 %s17, %s29
    %s127 = ssub.s32 %s18, %s25
    %s128 = sor.u32 %s126, %s127
    %p129 = scmp.eq.s32.totalorder %s128, 0
    %s131 = sadd.s32 %s130, 1
    %s132 = scalar_select %p129, %s130, %s131
    %p135 = pneg %p129
    %p136 = scmp.eq.s32.totalorder %s10, 1
    %p137 = por %p135, %p136
    %p138 = scmp.ne.s32.totalorder %s130, %s133
    %p139 = scmp.eq.s32.totalorder %s10, 0
    %p140 = por %p138, %p139
    %p141 = scmp.ne.s32.totalorder %s130, %s133
    %p142 = scmp.eq.s32.totalorder %s15, 1
    %p143 = por %p141, %p142
    %p144 = scmp.ne.s32.totalorder %s133, %s134
    %p145 = scmp.eq.s32.totalorder %s15, 0
    %p146 = por %p144, %p145
    %p147 = scmp.ne.s32.totalorder %s133, %s134
    %p148 = scmp.eq.s32.totalorder %s16, 1
    %p149 = por %p147, %p148
    %p151 = scmp.ne.s32.totalorder %s134, %s150
    %p152 = scmp.eq.s32.totalorder %s16, 0
    %p153 = por %p151, %p152
    %p154 = scmp.le.s32.totalorder 1, %s10
    %p155 = scmp.lt.s32.totalorder %s10, 3
    %p156 = pnand %p154, %p155
    %p157 = pneg %p156
    // Predicated region
    $region9: #{discriminator_forward.7} parent=5 // pred_check
      _
    $region10: #{discriminator_forward.7} parent=5 // pred_check_branch
      %159 = sbr.rel (%p156) target = $region12
    $region11: #{discriminator_forward.7} parent=5 // pred_region
      %s160 = ssub.s32 %s10, 1
      // Predicated region
      $region13: #{discriminator_forward.7} parent=11 // pred_check
        %p161 = pneg %p71
      $region14: #{discriminator_forward.7} parent=11 // pred_check_branch
        %163 = sbr.rel (%p161) target = $region16
      $region15: #{discriminator_forward.7} parent=11 // pred_region
        _
      $region16: #{discriminator_forward.7} parent=11 // pred_fallthru
        _
      // Predicated region
      $region17: #{discriminator_forward.7} parent=11 // pred_check
        %p164 = pneg %p92
      $region18: #{discriminator_forward.7} parent=11 // pred_check_branch
        %166 = sbr.rel (%p164) target = $region20
      $region19: #{discriminator_forward.7} parent=11 // pred_region
        _
      $region20: #{discriminator_forward.7} parent=11 // pred_fallthru
        _
      // Predicated region
      $region21: #{discriminator_forward.7} parent=11 // pred_check
        %p167 = pneg %p118
      $region22: #{discriminator_forward.7} parent=11 // pred_check_branch
        %169 = sbr.rel (%p167) target = $region24
      $region23: #{discriminator_forward.7} parent=11 // pred_region
        %p170 = scmp.lt.s32.totalorder %s20, 0
        %s171 = scalar_select %p170, %s20, 0
        %s172 = smul.addr %s171, 8
        %s173 = scalar_lea.vmem %s3, %s172
      $region24: #{discriminator_forward.7} parent=11 // pred_fallthru
        _
    $region12: #{discriminator_forward.7} parent=5 // pred_fallthru
      _
    %p174 = scmp.lt.s32.totalorder %s10, 2
    // Predicated region
    $region25: #{discriminator_forward.7} parent=5 // pred_check
      %p175 = pneg %p174
    $region26: #{discriminator_forward.7} parent=5 // pred_check_branch
      %177 = sbr.rel (%p175) target = $region28
    $region27: #{discriminator_forward.7} parent=5 // pred_region
      // Predicated region
      $region29: #{discriminator_forward.7} parent=27 // pred_check
        %p178 = pneg %p44
      $region30: #{discriminator_forward.7} parent=27 // pred_check_branch
        %180 = sbr.rel (%p178) target = $region32
      $region31: #{discriminator_forward.7} parent=27 // pred_region
        %p181 = scmp.lt.s32.totalorder %s17, 1
        %s182 = scalar_select %p181, %s17, 1
        %p183 = scmp.lt.s32.totalorder %s18, 0
        %s184 = scalar_select %p183, %s18, 0
        %s185 = sadd.s32 %s184, %s182
        %s186 = smul.addr %s185, 4
        %s187 = scalar_lea.vmem %s0, %s186
      $region32: #{discriminator_forward.7} parent=27 // pred_fallthru
        _
    $region28: #{discriminator_forward.7} parent=5 // pred_fallthru
      _
    %p188 = scmp.le.s32.totalorder 1, %s10
    %p189 = scmp.lt.s32.totalorder %s10, 3
    %p190 = pnand %p188, %p189
    %p191 = pneg %p190
    // Predicated region
    $region33: #{discriminator_forward.7} parent=5 // pred_check
      _
    $region34: #{discriminator_forward.7} parent=5 // pred_check_branch
      %193 = sbr.rel (%p190) target = $region36
    $region35: #{discriminator_forward.7} parent=5 // pred_region
      %s194 = ssub.s32 %s10, 1
      %p195 = scmp.lt.s32.totalorder %s19, 1
      %s196 = scalar_select %p195, %s19, 1
      %p197 = scmp.lt.s32.totalorder %s20, 0
      %s198 = scalar_select %p197, %s20, 0
      %s199 = sadd.s32 %s198, %s196
      %s200 = smul.addr %s199, 4
      %s201 = scalar_lea.vmem %s0, %s200
      %p202 = pneg %p50
      %p203 = pneg %p47
      %p204 = pneg %p71
      %p205 = pneg %p68
      %p206 = pneg %p92
      %p207 = pneg %p89
      %p208 = scmp.lt.s32.totalorder %s20, 0
      %s209 = scalar_select %p208, %s20, 0
      %s210 = smul.addr %s209, 8
      %s211 = scalar_lea.vmem %s3, %s210
      %p212 = pneg %p118
      %p213 = pneg %p115
      %p214 = pneg %p146
      %p215 = pneg %p143
      %p216 = scmp.lt.s32.totalorder %s19, 1
      %s217 = scalar_select %p216, %s19, 1
      %p218 = scmp.lt.s32.totalorder %s20, 0
      %s219 = scalar_select %p218, %s20, 0
      %s220 = smul.addr %s219, 2
      %s221 = smul.addr %s217, 2
      %s222 = sadd.s32 %s220, %s221
      %s223 = smul.addr %s222, 8
      %s224 = scalar_lea.vmem %s4, %s223
      %p225 = scmp.lt.s32.totalorder %s19, 1
      %s226 = scalar_select %p225, %s19, 1
      %p227 = scmp.lt.s32.totalorder %s20, 0
      %s228 = scalar_select %p227, %s20, 0
      %s229 = sadd.s32 %s228, %s226
      %s230 = smul.addr %s229, 4
      %s231 = scalar_lea.vmem %s0, %s230
      %p232 = scmp.lt.s32.totalorder %s20, 0
      %s233 = scalar_select %p232, %s20, 0
      %s234 = smul.addr %s233, 8
      %s235 = scalar_lea.vmem %s3, %s234
      %p236 = scmp.lt.s32.totalorder %s19, 1
      %s237 = scalar_select %p236, %s19, 1
      %p238 = scmp.lt.s32.totalorder %s20, 0
      %s239 = scalar_select %p238, %s20, 0
      %s240 = smul.addr %s239, 2
      %s241 = smul.addr %s237, 2
      %s242 = sadd.s32 %s240, %s241
      %s243 = smul.addr %s242, 8
      %s244 = scalar_lea.vmem %s4, %s243
      %v245 = vld [vmem:[%s231] sm:$0xf]
      %v246 = vunpack.c.l.bf16 %v245
      %v247 = vld [vmem:[%s1] sm:$0x1]
      %v249 = vlaneseq
      %v250 = vshrl.u32 %v249, 7
      %v251 = vsub.s32 0, %v250
      %v252 = vrot.slane %v247, %v251
      %v254 = vmul.f32 %v246, %v252
      %v255 = vld [vmem:[%s2] sm:$0x1]
      %v257 = vlaneseq
      %v258 = vshrl.u32 %v257, 7
      %v259 = vsub.s32 0, %v258
      %v260 = vrot.slane %v255, %v259
      %v262 = vadd.f32 %v254, %v260
      %vm263 = vcmp.ge.f32.partialorder %v262, 0.0
      %v264 = vmul.f32 %v262, 0.2
      %v265 = vsel %vm263, %v262, %v264
      %v266 = vld [vmem:[%s235] sm:$0xff]
      %268 = vset.pattern.permute.xlu0 0
      %269 = vperm.xlu0 %268, %v266
      %v270 = vpop.permute.xlu0 %269
      %v272 = vmul.f32 %v265, %v270
      %v273 = vrot.slane %v272, 4
      %v274 = vadd.f32 %v272, %v273
      %v275 = vrot.slane %v274, 2
      %v276 = vadd.f32 %v274, %v275
      %v277 = vrot.slane %v276, 1
      %v278 = vadd.f32 %v276, %v277
      %279 = vset.pattern.permute.xlu0 1
      %280 = vperm.xlu0 %279, %v266
      %v281 = vpop.permute.xlu0 %280
      %v283 = vmul.f32 %v265, %v281
      %v284 = vrot.slane %v283, 4
      %v285 = vadd.f32 %v283, %v284
      %v286 = vrot.slane %v285, 2
      %v287 = vadd.f32 %v285, %v286
      %v288 = vrot.slane %v287, 1
      %v289 = vadd.f32 %v287, %v288
      %290 = vset.pattern.permute.xlu0 2
      %291 = vperm.xlu0 %290, %v266
      %v292 = vpop.permute.xlu0 %291
      %v294 = vmul.f32 %v265, %v292
      %v295 = vrot.slane %v294, 4
      %v296 = vadd.f32 %v294, %v295
      %v297 = vrot.slane %v296, 2
      %v298 = vadd.f32 %v296, %v297
      %v299 = vrot.slane %v298, 1
      %v300 = vadd.f32 %v298, %v299
      %301 = vset.pattern.permute.xlu0 3
      %302 = vperm.xlu0 %301, %v266
      %v303 = vpop.permute.xlu0 %302
      %v305 = vmul.f32 %v265, %v303
      %v306 = vrot.slane %v305, 4
      %v307 = vadd.f32 %v305, %v306
      %v308 = vrot.slane %v307, 2
      %v309 = vadd.f32 %v307, %v308
      %v310 = vrot.slane %v309, 1
      %v311 = vadd.f32 %v309, %v310
      %312 = vset.pattern.permute.xlu0 4
      %313 = vperm.xlu0 %312, %v266
      %v314 = vpop.permute.xlu0 %313
      %v316 = vmul.f32 %v265, %v314
      %v317 = vrot.slane %v316, 4
      %v318 = vadd.f32 %v316, %v317
      %v319 = vrot.slane %v318, 2
      %v320 = vadd.f32 %v318, %v319
      %v321 = vrot.slane %v320, 1
      %v322 = vadd.f32 %v320, %v321
      %323 = vset.pattern.permute.xlu0 5
      %324 = vperm.xlu0 %323, %v266
      %v325 = vpop.permute.xlu0 %324
      %v327 = vmul.f32 %v265, %v325
      %v328 = vrot.slane %v327, 4
      %v329 = vadd.f32 %v327, %v328
      %v330 = vrot.slane %v329, 2
      %v331 = vadd.f32 %v329, %v330
      %v332 = vrot.slane %v331, 1
      %v333 = vadd.f32 %v331, %v332
      %334 = vset.pattern.permute.xlu0 6
      %335 = vperm.xlu0 %334, %v266
      %v336 = vpop.permute.xlu0 %335
      %v338 = vmul.f32 %v265, %v336
      %v339 = vrot.slane %v338, 4
      %v340 = vadd.f32 %v338, %v339
      %v341 = vrot.slane %v340, 2
      %v342 = vadd.f32 %v340, %v341
      %v343 = vrot.slane %v342, 1
      %v344 = vadd.f32 %v342, %v343
      %345 = vset.pattern.permute.xlu0 7
      %346 = vperm.xlu0 %345, %v266
      %v347 = vpop.permute.xlu0 %346
      %v349 = vmul.f32 %v265, %v347
      %v350 = vrot.slane %v349, 4
      %v351 = vadd.f32 %v349, %v350
      %v352 = vrot.slane %v351, 2
      %v353 = vadd.f32 %v351, %v352
      %v354 = vrot.slane %v353, 1
      %v355 = vadd.f32 %v353, %v354
      %356 = vset.pattern.permute.xlu0 8
      %357 = vperm.xlu0 %356, %v266
      %v358 = vpop.permute.xlu0 %357
      %v360 = vmul.f32 %v265, %v358
      %v361 = vrot.slane %v360, 4
      %v362 = vadd.f32 %v360, %v361
      %v363 = vrot.slane %v362, 2
      %v364 = vadd.f32 %v362, %v363
      %v365 = vrot.slane %v364, 1
      %v366 = vadd.f32 %v364, %v365
      %vm367 = vcmask 1040384
      %v368 = vsel %vm367, %v278, %v289
      %vm369 = vcmask 1041408
      %v370 = vsel %vm369, %v368, %v300
      %vm371 = vcmask 1042432
      %v372 = vsel %vm371, %v370, %v311
      %vm373 = vcmask 1043456
      %v374 = vsel %vm373, %v372, %v322
      %vm375 = vcmask 1044480
      %v376 = vsel %vm375, %v374, %v333
      %vm377 = vcmask 1045504
      %v378 = vsel %vm377, %v376, %v344
      %vm379 = vcmask 1046528
      %v380 = vsel %vm379, %v378, %v355
      %381 = vst [vmem:[%s244] sm:$0xff] %v380
      %382 = vst [vmem:[%s244 + $0x8] sm:$0x1] %v366
      %p383 = scmp.lt.s32.totalorder %s19, 1
      %s384 = scalar_select %p383, %s19, 1
      %p385 = scmp.lt.s32.totalorder %s20, 0
      %s386 = scalar_select %p385, %s20, 0
      %s387 = smul.addr %s386, 2
      %s388 = smul.addr %s384, 2
      %s389 = sadd.s32 %s387, %s388
      %s390 = smul.addr %s389, 8
      %s391 = scalar_lea.vmem %s4, %s390
      // Predicated region
      $region37: #{discriminator_forward.7} parent=35 // pred_check
        %p392 = pneg %p143
      $region38: #{discriminator_forward.7} parent=35 // pred_check_branch
        %394 = sbr.rel (%p392) target = $region40
      $region39: #{discriminator_forward.7} parent=35 // pred_region
        _
      $region40: #{discriminator_forward.7} parent=35 // pred_fallthru
        _
    $region36: #{discriminator_forward.7} parent=5 // pred_fallthru
      _
    %p395 = scmp.le.s32.totalorder 2, %s10
    // Predicated region
    $region41: #{discriminator_forward.7} parent=5 // pred_check
      %p396 = pneg %p395
    $region42: #{discriminator_forward.7} parent=5 // pred_check_branch
      %398 = sbr.rel (%p396) target = $region44
    $region43: #{discriminator_forward.7} parent=5 // pred_region
      %s399 = ssub.s32 %s10, 2
      // Predicated region
      $region45: #{discriminator_forward.7} parent=43 // pred_check
        %p400 = pneg %p149
      $region46: #{discriminator_forward.7} parent=43 // pred_check_branch
        %402 = sbr.rel (%p400) target = $region48
      $region47: #{discriminator_forward.7} parent=43 // pred_region
        %p403 = scmp.lt.s32.totalorder %s21, 1
        %s404 = scalar_select %p403, %s21, 1
        %p405 = scmp.lt.s32.totalorder %s22, 0
        %s406 = scalar_select %p405, %s22, 0
        %s407 = smul.addr %s406, 2
        %s408 = smul.addr %s404, 2
        %s409 = sadd.s32 %s407, %s408
        %s410 = smul.addr %s409, 8
        %s411 = scalar_lea.vmem %s4, %s410
      $region48: #{discriminator_forward.7} parent=43 // pred_fallthru
        _
    $region44: #{discriminator_forward.7} parent=5 // pred_fallthru
      _
  $region6: #{discriminator_forward.7} parent=0 // loop_footer
    %s14 = sadd.s32 1, %s10
  $region7: #{discriminator_forward.7} parent=0 // loop_footer_branch
    %9 = sbr.rel target = $region3
  $region8: #{discriminator_forward.7} parent=0 // loop_exit
    _

</llo_original>
